<compile_context>
chip_gen: v7x
topology: tpu7x:2x2x1
jax: 0.10.0
libtpu: 0.0.40
codegen_flags: <defaults>
</compile_context>

<pallas_src>
import functools

import jax
import jax.numpy as jnp
from jax.experimental import pallas as pl
from jax.experimental.pallas import tpu as pltpu


def _cdiv(a, b):
    return -(-a // b)


def _round_up(x, m):
    return _cdiv(x, m) * m


def feedforward_kernel(aff1_ref, x_ref, w1t_ref, b1_ref, w2t_ref, b2_ref,
                       o_ref, acc_ref, *, h_chunks, approximate_gelu):
    """One (TM, F) row block: aff1 -> fc1 -> GELU -> fc2(+aff2 folded) -> +residual."""
    x = x_ref[...]                                        # (TM, F) f32
    residual = aff1_ref[0:1, :] * x + aff1_ref[1:2, :]    # aff1; also the residual (f32)
    res_mxu = residual.astype(w1t_ref.dtype)              # bf16 (or f32) MXU operand

    hidden = w1t_ref.shape[1]
    th = hidden // h_chunks                               # static, multiple of 128

    for c in range(h_chunks):                             # static Python loop
        lo, hi = c * th, (c + 1) * th
        h = jnp.dot(res_mxu, w1t_ref[:, lo:hi],
                    preferred_element_type=jnp.float32) + b1_ref[:, lo:hi]
        h = jax.nn.gelu(h, approximate=approximate_gelu)  # tanh -> EUP; erf behind flag
        zc = jnp.dot(h.astype(w2t_ref.dtype), w2t_ref[lo:hi, :],
                     preferred_element_type=jnp.float32)
        if h_chunks == 1:
            # Single-chunk fast path: skip the VMEM accumulator round-trip.
            o_ref[...] = zc + b2_ref[...] + residual
        elif c == 0:
            acc_ref[...] = zc
        else:
            acc_ref[...] += zc

    if h_chunks > 1:
        o_ref[...] = acc_ref[...] + b2_ref[...] + residual


@functools.partial(
    jax.jit,
    static_argnames=("block_rows", "h_block", "matmul_dtype",
                     "approximate_gelu", "weight_buffers"))
def feedforward(x, w1, b1, w2, b2, alpha1, beta1, alpha2, beta2, *,
                block_rows=256, h_block=1024,
                matmul_dtype=jnp.bfloat16, approximate_gelu=True,
                weight_buffers=1):
    """x: (B, S, F).  w1: (H, F), b1: (H,), w2: (F, H), b2: (F,).
    alpha*/beta*: (F,) AffineTransform params (PyTorch's (1,1,F) squeezed)."""
    B, S, F = x.shape
    H = w1.shape[0]
    N = B * S

    x2 = x.reshape(N, F).astype(jnp.float32)

    # ---- row blocking ------------------------------------------------------
    if N >= 8:
        TM = min(_round_up(block_rows, 8), _round_up(N, 8))
        if _cdiv(N, TM) < 2 and N >= 16:
            # >= 2 grid steps so a v7x megacore can shard the "parallel" axis.
            TM = _round_up(_cdiv(N, 2), 8)
    else:
        TM = N                    # tiny input: block dim == full array dim
    grid_m = _cdiv(N, TM)
    # No wrapper-side pad / slice: a ragged final block (N % TM != 0) is handled
    # by the pipeline; out-of-range rows are never written back to HBM.

    # ---- hidden-dim chunking (caps the (TM, th) GELU intermediate) ----------
    th = H
    if H > h_block:
        cand = max(128, (min(h_block, H) // 128) * 128)
        while cand > 128 and H % cand != 0:
            cand -= 128
        if H % cand == 0:
            th = cand
    h_chunks = H // th

    # ---- loop-invariant folds, once per call --------------------------------
    w1t = w1.T.astype(matmul_dtype)                          # (F, H)
    b1_row = b1.reshape(1, H).astype(jnp.float32)
    w2t = (w2.T * alpha2[None, :]).astype(matmul_dtype)      # (H, F): aff2 scale folded
    b2_row = (alpha2 * b2 + beta2).reshape(1, F).astype(jnp.float32)
    aff1 = jnp.stack([alpha1, beta1]).astype(jnp.float32)    # (2, F)

    # ---- specs ---------------------------------------------------------------
    pipeline_mode = pl.Buffered(weight_buffers) if weight_buffers != 2 else None

    def const(shape):
        return pl.BlockSpec(shape, lambda i, _nd=len(shape): (0,) * _nd,
                            pipeline_mode=pipeline_mode)

    in_specs = [
        const((2, F)),                               # aff1 alpha/beta
        pl.BlockSpec((TM, F), lambda i: (i, 0)),     # x row block (double-buffered)
        const((F, H)),                               # W1^T
        const((1, H)),                               # b1
        const((H, F)),                               # W2^T (aff2-scaled)
        const((1, F)),                               # b2 (aff2-folded)
    ]
    out_spec = pl.BlockSpec((TM, F), lambda i: (i, 0))

    # ---- VMEM budget & cost hint ---------------------------------------------
    wbytes = jnp.dtype(matmul_dtype).itemsize
    est_vmem = (
        4 * TM * F * 4                              # x + out blocks, double-buffered f32
        + 2 * F * H * wbytes * max(1, weight_buffers)   # W1^T + W2^T residency
        + (H + 3 * F) * 4                           # b1, b2, aff1
        + TM * F * 4                                # f32 accumulator scratch
        + 2 * TM * th * 4                           # live (TM, th) hidden intermediate
    )
    vmem_limit = int(min(64 * 2**20, max(32 * 2**20, 2 * est_vmem)))

    cost = pl.CostEstimate(
        flops=4 * N * F * H,                        # two (N,F)x(F,H)-class matmuls
        transcendentals=N * H,                      # GELU
        bytes_accessed=2 * N * F * 4 + 2 * F * H * wbytes + (H + 3 * F) * 4,
    )

    kernel = functools.partial(feedforward_kernel,
                               h_chunks=h_chunks,
                               approximate_gelu=approximate_gelu)

    out = pl.pallas_call(
        kernel,
        out_shape=jax.ShapeDtypeStruct((N, F), jnp.float32),
        grid=(grid_m,),
        in_specs=in_specs,
        out_specs=out_spec,
        scratch_shapes=[pltpu.VMEM((TM, F), jnp.float32)],
        compiler_params=pltpu.CompilerParams(
            dimension_semantics=("parallel",),
            vmem_limit_bytes=vmem_limit),
        cost_estimate=cost,
    )(aff1, x2, w1t, b1_row, w2t, b2_row)

    return out.reshape(B, S, F)


def feedforward_ref(x, w1, b1, w2, b2, alpha1, beta1, alpha2, beta2):
    """Pure-JAX reference mirroring the PyTorch FeedForward.forward exactly."""
    a1, be1 = alpha1[None, None, :], beta1[None, None, :]
    a2, be2 = alpha2[None, None, :], beta2[None, None, :]
    x = a1 * x + be1
    residual = x
    h = jnp.einsum("bsf,hf->bsh", x, w1,
                   precision=jax.lax.Precision.HIGHEST) + b1
    h = jax.nn.gelu(h, approximate=False)
    z = jnp.einsum("bsh,fh->bsf", h, w2,
                   precision=jax.lax.Precision.HIGHEST) + b2
    z = a2 * z + be2
    return z + residual


if __name__ == "__main__":
    B, S, F, E = 2, 8, 128, 4          # batch, seq, num_features, expansion_factor
    H = F * E

    key = jax.random.PRNGKey(0)
    keys = jax.random.split(key, 7)

    x = jax.random.normal(keys[0], (B, S, F), dtype=jnp.float32)

    # Linear weights, PyTorch-style uniform(-1/sqrt(fan_in), 1/sqrt(fan_in)).
    w1 = jax.random.uniform(keys[1], (H, F), jnp.float32, -1.0, 1.0) / jnp.sqrt(F)
    b1 = jax.random.uniform(keys[2], (H,), jnp.float32, -1.0, 1.0) / jnp.sqrt(F)
    w2 = jax.random.uniform(keys[3], (F, H), jnp.float32, -1.0, 1.0) / jnp.sqrt(H)
    b2 = jax.random.uniform(keys[4], (F,), jnp.float32, -1.0, 1.0) / jnp.sqrt(H)

    # AffineTransform init is alpha=1, beta=0; perturb so the path is exercised.
    alpha1 = 1.0 + 0.1 * jax.random.normal(keys[5], (F,), dtype=jnp.float32)
    beta1 = 0.1 * jax.random.normal(keys[6], (F,), dtype=jnp.float32)
    alpha2 = 1.0 - 0.05 * alpha1
    beta2 = 0.05 * beta1 - 0.02

    run = functools.partial(feedforward, x, w1, b1, w2, b2,
                            alpha1, beta1, alpha2, beta2)
    ref = feedforward_ref(x, w1, b1, w2, b2, alpha1, beta1, alpha2, beta2)

    # Fast path (default): bf16 MXU operands, tanh GELU, single-buffered weights.
    try:
        out_fast = run()
    except Exception:
        # pl.Buffered(1) unavailable on this jax version -> keep default buffering.
        run = functools.partial(run, weight_buffers=2)
        out_fast = run()
    out_fast = jax.block_until_ready(out_fast)
    assert out_fast.shape == (B, S, F)
    err_fast = jnp.max(jnp.abs(out_fast - ref))
    assert jnp.allclose(out_fast, ref, atol=5e-2, rtol=5e-2), f"fast path err {err_fast}"

    # Exact parity path: f32 MXU operands + erf GELU (matches PyTorch semantics).
    out_exact = jax.block_until_ready(
        run(matmul_dtype=jnp.float32, approximate_gelu=False))
    err_exact = jnp.max(jnp.abs(out_exact - ref))
    assert jnp.allclose(out_exact, ref, atol=5e-4, rtol=5e-4), f"exact path err {err_exact}"

    print("KERNEL_OK")
</pallas_src>

<mosaic_0001>
module attributes {stable_mosaic.version = 11 : i64} {
  func.func @feedforward_kernel(%arg0: i32, %arg1: memref<2x128xf32, #tpu.memory_space<vmem>>, %arg2: memref<8x128xf32, #tpu.memory_space<vmem>>, %arg3: memref<128x512xbf16, #tpu.memory_space<vmem>>, %arg4: memref<1x512xf32, #tpu.memory_space<vmem>>, %arg5: memref<512x128xbf16, #tpu.memory_space<vmem>>, %arg6: memref<1x128xf32, #tpu.memory_space<vmem>>, %arg7: memref<8x128xf32, #tpu.memory_space<vmem>>, %arg8: memref<8x128xf32, #tpu.memory_space<vmem>>) attributes {dimension_semantics = [#tpu.dimension_semantics<parallel>], iteration_bounds = array<i64: 2>, scalar_prefetch = 0 : i64, scratch_operands = 1 : i64, tpu.core_type = #tpu.core_type<tc>, window_params = [{pipeline_mode = #tpu.pipeline_mode<synchronous>, transform_indices = @transform_0, window_bounds = array<i64: 2, 128>}, {transform_indices = @transform_1, window_bounds = array<i64: 8, 128>}, {pipeline_mode = #tpu.pipeline_mode<synchronous>, transform_indices = @transform_2, window_bounds = array<i64: 128, 512>}, {pipeline_mode = #tpu.pipeline_mode<synchronous>, transform_indices = @transform_3, window_bounds = array<i64: 1, 512>}, {pipeline_mode = #tpu.pipeline_mode<synchronous>, transform_indices = @transform_4, window_bounds = array<i64: 512, 128>}, {pipeline_mode = #tpu.pipeline_mode<synchronous>, transform_indices = @transform_5, window_bounds = array<i64: 1, 128>}, {transform_indices = @transform_6, window_bounds = array<i64: 8, 128>}]} {
    %c0 = arith.constant 0 : index
    %c0_0 = arith.constant 0 : index
    %0 = vector.load %arg2[%c0, %c0_0] : memref<8x128xf32, #tpu.memory_space<vmem>>, vector<8x128xf32>
    %c0_1 = arith.constant 0 : index
    %c0_2 = arith.constant 0 : index
    %1 = vector.load %arg1[%c0_1, %c0_2] : memref<2x128xf32, #tpu.memory_space<vmem>>, vector<1x128xf32>
    %2 = vector.broadcast %1 : vector<1x128xf32> to vector<8x128xf32>
    %3 = arith.mulf %2, %0 : vector<8x128xf32>
    %c1 = arith.constant 1 : index
    %c0_3 = arith.constant 0 : index
    %4 = vector.load %arg1[%c1, %c0_3] : memref<2x128xf32, #tpu.memory_space<vmem>>, vector<1x128xf32>
    %5 = vector.broadcast %4 : vector<1x128xf32> to vector<8x128xf32>
    %6 = arith.addf %3, %5 : vector<8x128xf32>
    %7 = arith.truncf %6 : vector<8x128xf32> to vector<8x128xbf16>
    %c0_4 = arith.constant 0 : index
    %c0_5 = arith.constant 0 : index
    %8 = vector.load %arg3[%c0_4, %c0_5] : memref<128x512xbf16, #tpu.memory_space<vmem>>, vector<128x512xbf16>
    %cst = arith.constant dense<0.000000e+00> : vector<8x512xf32>
    %9 = tpu.matmul %7, %8, %cst {dimension_numbers = #tpu.dot_dimension_numbers<[1], [0], [0], [1], [0, 0, 1, 1], [], []>} : vector<8x128xbf16>, vector<128x512xbf16>, vector<8x512xf32> -> vector<8x512xf32>
    %c0_6 = arith.constant 0 : index
    %c0_7 = arith.constant 0 : index
    %10 = vector.load %arg4[%c0_6, %c0_7] : memref<1x512xf32, #tpu.memory_space<vmem>>, vector<1x512xf32>
    %11 = vector.broadcast %10 : vector<1x512xf32> to vector<8x512xf32>
    %12 = arith.addf %9, %11 : vector<8x512xf32>
    %13 = arith.mulf %12, %12 : vector<8x512xf32>
    %14 = arith.mulf %12, %13 : vector<8x512xf32>
    %cst_8 = arith.constant 4.471500e-02 : f32
    %15 = vector.broadcast %cst_8 : f32 to vector<8x512xf32>
    %16 = arith.mulf %15, %14 : vector<8x512xf32>
    %17 = arith.addf %12, %16 : vector<8x512xf32>
    %cst_9 = arith.constant 0.797884583 : f32
    %18 = vector.broadcast %cst_9 : f32 to vector<8x512xf32>
    %19 = arith.mulf %18, %17 : vector<8x512xf32>
    %20 = math.tanh %19 : vector<8x512xf32>
    %cst_10 = arith.constant 1.000000e+00 : f32
    %21 = vector.broadcast %cst_10 : f32 to vector<8x512xf32>
    %22 = arith.addf %21, %20 : vector<8x512xf32>
    %cst_11 = arith.constant 5.000000e-01 : f32
    %23 = vector.broadcast %cst_11 : f32 to vector<8x512xf32>
    %24 = arith.mulf %23, %22 : vector<8x512xf32>
    %25 = arith.mulf %12, %24 : vector<8x512xf32>
    %26 = arith.truncf %25 : vector<8x512xf32> to vector<8x512xbf16>
    %c0_12 = arith.constant 0 : index
    %c0_13 = arith.constant 0 : index
    %27 = vector.load %arg5[%c0_12, %c0_13] : memref<512x128xbf16, #tpu.memory_space<vmem>>, vector<512x128xbf16>
    %cst_14 = arith.constant dense<0.000000e+00> : vector<8x128xf32>
    %28 = tpu.matmul %26, %27, %cst_14 {dimension_numbers = #tpu.dot_dimension_numbers<[1], [0], [0], [1], [0, 0, 1, 1], [], []>} : vector<8x512xbf16>, vector<512x128xbf16>, vector<8x128xf32> -> vector<8x128xf32>
    %c0_15 = arith.constant 0 : index
    %c0_16 = arith.constant 0 : index
    %29 = vector.load %arg6[%c0_15, %c0_16] : memref<1x128xf32, #tpu.memory_space<vmem>>, vector<1x128xf32>
    %30 = vector.broadcast %29 : vector<1x128xf32> to vector<8x128xf32>
    %31 = arith.addf %28, %30 : vector<8x128xf32>
    %32 = arith.addf %31, %6 : vector<8x128xf32>
    %c0_17 = arith.constant 0 : index
    %c0_18 = arith.constant 0 : index
    %33 = vector.load %arg7[%c0_17, %c0_18] : memref<8x128xf32, #tpu.memory_space<vmem>>, vector<8x128xf32>
    tpu.vector_store %arg7[%c0_17, %c0_18], %32 {strides = array<i32>} : memref<8x128xf32, #tpu.memory_space<vmem>>, vector<8x128xf32>,
    return
  }
  func.func @transform_0(%arg0: i32) -> (i32, i32) {
    %c0_i32 = arith.constant 0 : i32
    %c0_i32_0 = arith.constant 0 : i32
    %c0_i32_1 = arith.constant 0 : i32
    return %c0_i32, %c0_i32_0 : i32, i32
  }
  func.func @transform_1(%arg0: i32) -> (i32, i32) {
    %c0_i32 = arith.constant 0 : i32
    %c0_i32_0 = arith.constant 0 : i32
    return %arg0, %c0_i32 : i32, i32
  }
  func.func @transform_2(%arg0: i32) -> (i32, i32) {
    %c0_i32 = arith.constant 0 : i32
    %c0_i32_0 = arith.constant 0 : i32
    %c0_i32_1 = arith.constant 0 : i32
    return %c0_i32, %c0_i32_0 : i32, i32
  }
  func.func @transform_3(%arg0: i32) -> (i32, i32) {
    %c0_i32 = arith.constant 0 : i32
    %c0_i32_0 = arith.constant 0 : i32
    %c0_i32_1 = arith.constant 0 : i32
    return %c0_i32, %c0_i32_0 : i32, i32
  }
  func.func @transform_4(%arg0: i32) -> (i32, i32) {
    %c0_i32 = arith.constant 0 : i32
    %c0_i32_0 = arith.constant 0 : i32
    %c0_i32_1 = arith.constant 0 : i32
    return %c0_i32, %c0_i32_0 : i32, i32
  }
  func.func @transform_5(%arg0: i32) -> (i32, i32) {
    %c0_i32 = arith.constant 0 : i32
    %c0_i32_0 = arith.constant 0 : i32
    %c0_i32_1 = arith.constant 0 : i32
    return %c0_i32, %c0_i32_0 : i32, i32
  }
  func.func @transform_6(%arg0: i32) -> (i32, i32) {
    %c0_i32 = arith.constant 0 : i32
    %c0_i32_0 = arith.constant 0 : i32
    return %arg0, %c0_i32 : i32, i32
  }
}

module attributes {stable_mosaic.version = 11 : i64} {
  func.func @feedforward_kernel(%arg0: i32, %arg1: memref<2x128xf32, #tpu.memory_space<vmem>>, %arg2: memref<8x128xf32, #tpu.memory_space<vmem>>, %arg3: memref<128x512xbf16, #tpu.memory_space<vmem>>, %arg4: memref<1x512xf32, #tpu.memory_space<vmem>>, %arg5: memref<512x128xbf16, #tpu.memory_space<vmem>>, %arg6: memref<1x128xf32, #tpu.memory_space<vmem>>, %arg7: memref<8x128xf32, #tpu.memory_space<vmem>>, %arg8: memref<8x128xf32, #tpu.memory_space<vmem>>) attributes {dimension_semantics = [#tpu.dimension_semantics<parallel>], iteration_bounds = array<i64: 2>, scalar_prefetch = 0 : i64, scratch_operands = 1 : i64, tpu.core_type = #tpu.core_type<tc>, window_params = [{pipeline_mode = #tpu.pipeline_mode<synchronous>, transform_indices = @transform_0, window_bounds = array<i64: 2, 128>}, {transform_indices = @transform_1, window_bounds = array<i64: 8, 128>}, {pipeline_mode = #tpu.pipeline_mode<synchronous>, transform_indices = @transform_2, window_bounds = array<i64: 128, 512>}, {pipeline_mode = #tpu.pipeline_mode<synchronous>, transform_indices = @transform_3, window_bounds = array<i64: 1, 512>}, {pipeline_mode = #tpu.pipeline_mode<synchronous>, transform_indices = @transform_4, window_bounds = array<i64: 512, 128>}, {pipeline_mode = #tpu.pipeline_mode<synchronous>, transform_indices = @transform_5, window_bounds = array<i64: 1, 128>}, {transform_indices = @transform_6, window_bounds = array<i64: 8, 128>}]} {
    %c0 = arith.constant 0 : index
    %c0_0 = arith.constant 0 : index
    %0 = vector.load %arg2[%c0, %c0_0] : memref<8x128xf32, #tpu.memory_space<vmem>>, vector<8x128xf32>
    %c0_1 = arith.constant 0 : index
    %c0_2 = arith.constant 0 : index
    %1 = vector.load %arg1[%c0_1, %c0_2] : memref<2x128xf32, #tpu.memory_space<vmem>>, vector<1x128xf32>
    %2 = vector.broadcast %1 : vector<1x128xf32> to vector<8x128xf32>
    %3 = arith.mulf %2, %0 : vector<8x128xf32>
    %c1 = arith.constant 1 : index
    %c0_3 = arith.constant 0 : index
    %4 = vector.load %arg1[%c1, %c0_3] : memref<2x128xf32, #tpu.memory_space<vmem>>, vector<1x128xf32>
    %5 = vector.broadcast %4 : vector<1x128xf32> to vector<8x128xf32>
    %6 = arith.addf %3, %5 : vector<8x128xf32>
    %7 = arith.truncf %6 : vector<8x128xf32> to vector<8x128xbf16>
    %c0_4 = arith.constant 0 : index
    %c0_5 = arith.constant 0 : index
    %8 = vector.load %arg3[%c0_4, %c0_5] : memref<128x512xbf16, #tpu.memory_space<vmem>>, vector<128x512xbf16>
    %cst = arith.constant dense<0.000000e+00> : vector<8x512xf32>
    %9 = tpu.matmul %7, %8, %cst {dimension_numbers = #tpu.dot_dimension_numbers<[1], [0], [0], [1], [0, 0, 1, 1], [], []>} : vector<8x128xbf16>, vector<128x512xbf16>, vector<8x512xf32> -> vector<8x512xf32>
    %c0_6 = arith.constant 0 : index
    %c0_7 = arith.constant 0 : index
    %10 = vector.load %arg4[%c0_6, %c0_7] : memref<1x512xf32, #tpu.memory_space<vmem>>, vector<1x512xf32>
    %11 = vector.broadcast %10 : vector<1x512xf32> to vector<8x512xf32>
    %12 = arith.addf %9, %11 : vector<8x512xf32>
    %13 = arith.mulf %12, %12 : vector<8x512xf32>
    %14 = arith.mulf %12, %13 : vector<8x512xf32>
    %cst_8 = arith.constant 4.471500e-02 : f32
    %15 = vector.broadcast %cst_8 : f32 to vector<8x512xf32>
    %16 = arith.mulf %15, %14 : vector<8x512xf32>
    %17 = arith.addf %12, %16 : vector<8x512xf32>
    %cst_9 = arith.constant 0.797884583 : f32
    %18 = vector.broadcast %cst_9 : f32 to vector<8x512xf32>
    %19 = arith.mulf %18, %17 : vector<8x512xf32>
    %20 = math.tanh %19 : vector<8x512xf32>
    %cst_10 = arith.constant 1.000000e+00 : f32
    %21 = vector.broadcast %cst_10 : f32 to vector<8x512xf32>
    %22 = arith.addf %21, %20 : vector<8x512xf32>
    %cst_11 = arith.constant 5.000000e-01 : f32
    %23 = vector.broadcast %cst_11 : f32 to vector<8x512xf32>
    %24 = arith.mulf %23, %22 : vector<8x512xf32>
    %25 = arith.mulf %12, %24 : vector<8x512xf32>
    %26 = arith.truncf %25 : vector<8x512xf32> to vector<8x512xbf16>
    %c0_12 = arith.constant 0 : index
    %c0_13 = arith.constant 0 : index
    %27 = vector.load %arg5[%c0_12, %c0_13] : memref<512x128xbf16, #tpu.memory_space<vmem>>, vector<512x128xbf16>
    %cst_14 = arith.constant dense<0.000000e+00> : vector<8x128xf32>
    %28 = tpu.matmul %26, %27, %cst_14 {dimension_numbers = #tpu.dot_dimension_numbers<[1], [0], [0], [1], [0, 0, 1, 1], [], []>} : vector<8x512xbf16>, vector<512x128xbf16>, vector<8x128xf32> -> vector<8x128xf32>
    %c0_15 = arith.constant 0 : index
    %c0_16 = arith.constant 0 : index
    %29 = vector.load %arg6[%c0_15, %c0_16] : memref<1x128xf32, #tpu.memory_space<vmem>>, vector<1x128xf32>
    %30 = vector.broadcast %29 : vector<1x128xf32> to vector<8x128xf32>
    %31 = arith.addf %28, %30 : vector<8x128xf32>
    %32 = arith.addf %31, %6 : vector<8x128xf32>
    %c0_17 = arith.constant 0 : index
    %c0_18 = arith.constant 0 : index
    %33 = vector.load %arg7[%c0_17, %c0_18] : memref<8x128xf32, #tpu.memory_space<vmem>>, vector<8x128xf32>
    tpu.vector_store %arg7[%c0_17, %c0_18], %32 {strides = array<i32>} : memref<8x128xf32, #tpu.memory_space<vmem>>, vector<8x128xf32>,
    return
  }
  func.func @transform_0(%arg0: i32) -> (i32, i32) {
    %c0_i32 = arith.constant 0 : i32
    %c0_i32_0 = arith.constant 0 : i32
    %c0_i32_1 = arith.constant 0 : i32
    return %c0_i32, %c0_i32_0 : i32, i32
  }
  func.func @transform_1(%arg0: i32) -> (i32, i32) {
    %c0_i32 = arith.constant 0 : i32
    %c0_i32_0 = arith.constant 0 : i32
    return %arg0, %c0_i32 : i32, i32
  }
  func.func @transform_2(%arg0: i32) -> (i32, i32) {
    %c0_i32 = arith.constant 0 : i32
    %c0_i32_0 = arith.constant 0 : i32
    %c0_i32_1 = arith.constant 0 : i32
    return %c0_i32, %c0_i32_0 : i32, i32
  }
  func.func @transform_3(%arg0: i32) -> (i32, i32) {
    %c0_i32 = arith.constant 0 : i32
    %c0_i32_0 = arith.constant 0 : i32
    %c0_i32_1 = arith.constant 0 : i32
    return %c0_i32, %c0_i32_0 : i32, i32
  }
  func.func @transform_4(%arg0: i32) -> (i32, i32) {
    %c0_i32 = arith.constant 0 : i32
    %c0_i32_0 = arith.constant 0 : i32
    %c0_i32_1 = arith.constant 0 : i32
    return %c0_i32, %c0_i32_0 : i32, i32
  }
  func.func @transform_5(%arg0: i32) -> (i32, i32) {
    %c0_i32 = arith.constant 0 : i32
    %c0_i32_0 = arith.constant 0 : i32
    %c0_i32_1 = arith.constant 0 : i32
    return %c0_i32, %c0_i32_0 : i32, i32
  }
  func.func @transform_6(%arg0: i32) -> (i32, i32) {
    %c0_i32 = arith.constant 0 : i32
    %c0_i32_0 = arith.constant 0 : i32
    return %arg0, %c0_i32 : i32, i32
  }
}

</mosaic_0001>

<llo_original>
// kernel: feedforward.1
$region0: #{feedforward.1}
  #allocation0 [shape = 'u32[]', space=smem, size = 0x4, offset = 0x4, fixed_abs, tag = 'smem constant byte address 0x4 - core index']
  #allocation1 [shape = 'u32[144,128]{1,0:T(1,128)}', space=vmem, size = 0x12000, scoped, tag = 'internal scratch']
  #allocation2 [shape = 'f32[8,128]{1,0:T(8,128)}', space=vmem, size = 0x1000, scoped, tag = 'scratch operand']
  %s0 = inlined_call_operand.vmem [shape: f32[2,128], index: 0, kind: input, shape index: {}]
  %s1 = inlined_call_operand.vmem [shape: f32[16,128], index: 1, kind: input, shape index: {}]
  %s2 = inlined_call_operand.vmem [shape: bf16[128,512], index: 2, kind: input, shape index: {}]
  %s3 = inlined_call_operand.vmem [shape: f32[1,512], index: 3, kind: input, shape index: {}]
  %s4 = inlined_call_operand.vmem [shape: bf16[512,128], index: 4, kind: input, shape index: {}]
  %s5 = inlined_call_operand.vmem [shape: f32[1,128], index: 5, kind: input, shape index: {}]
  %s6 = inlined_call_operand.hbm [shape: f32[16,128], index: 6, kind: output, shape index: {}]
  %s7 = sld [smem:[#allocation0]]
  $region57: #{feedforward.1} parent=0
    _
  %s9 = ssub.s32 1, %s7
  %s10 = scalar_select 0, %s9, %s7
  $region1: #{feedforward.1} parent=0
    #allocation3 [shape = 'u8[8192]{0}', space=vmem, size = 0x2000, scoped, tag = 'output window, operand 0']
    #allocation4 [shape = 's32[2]{0}', space=sflag, size = 0x8, scoped, tag = 'scoped memory for feedforward.1']
    %11 = vsyncpa [#allocation4], 0
    %s12 = scalar_lea.sflag [#allocation4], 1
    %13 = vsyncpa %s12, 0
    loop: start=0, step=1, limit=4
    $region2: #{feedforward.1} parent=1 // loop_pre_header
      _
    $region3: #{feedforward.1} parent=1 // loop_header
      %s15 = sphi 0, %s19
      %p16 = scmp.ge.s32.totalorder %s15, 4
      %s23 = sphi 0, %s23
      %s25 = sphi 0, %s23
      %s26 = sphi 0, %s25
      %s40 = sphi 0, %s26
      %s46 = sphi 0, %s48
      %s49 = sphi 0, %s46
      %s50 = sphi 0, %s49
      %s66 = sphi 0, %s50
      %s70 = sphi 0, %s70
      %s72 = sphi 0, %s70
      %s73 = sphi 0, %s72
      %s87 = sphi 0, %s73
      %s91 = sphi 0, %s91
      %s93 = sphi 0, %s91
      %s94 = sphi 0, %s93
      %s108 = sphi 0, %s94
      %s112 = sphi 0, %s112
      %s114 = sphi 0, %s112
      %s115 = sphi 0, %s114
      %s129 = sphi 0, %s115
      %s133 = sphi 0, %s133
      %s135 = sphi 0, %s133
      %s136 = sphi 0, %s135
      %s150 = sphi 0, %s136
      %s156 = sphi 0, %s158
      %s159 = sphi 0, %s156
      %s160 = sphi 0, %s159
      %s176 = sphi 0, %s160
    $region4: #{feedforward.1} parent=1 // loop_header_branch
      %18 = sbr.rel (%p16) target = $region8
    $region5: #{feedforward.1} parent=1 // loop_body
      %s20 = ssub.s32 %s15, 1
      %s21 = ssub.s32 %s15, 2
      %s22 = sadd.s32 %s15, 1
      %s24 = sadd.s32 %s23, 1
      %p27 = scmp.eq.s32.totalorder %s15, 1
      %p28 = scmp.ne.s32.totalorder %s23, %s25
      %p29 = scmp.eq.s32.totalorder %s15, 0
      %p30 = por %p28, %p29
      %p31 = scmp.ne.s32.totalorder %s23, %s25
      %p32 = scmp.eq.s32.totalorder %s20, 1
      %p33 = por %p31, %p32
      %p34 = scmp.ne.s32.totalorder %s25, %s26
      %p35 = scmp.eq.s32.totalorder %s20, 0
      %p36 = por %p34, %p35
      %p37 = scmp.ne.s32.totalorder %s25, %s26
      %p38 = scmp.eq.s32.totalorder %s21, 1
      %p39 = por %p37, %p38
      %p41 = scmp.ne.s32.totalorder %s26, %s40
      %p42 = scmp.eq.s32.totalorder %s21, 0
      %p43 = por %p41, %p42
      %s44 = ssub.s32 %s15, %s22
      %p45 = scmp.eq.s32.totalorder %s44, 0
      %s47 = sadd.s32 %s46, 1
      %s48 = scalar_select %p45, %s46, %s47
      %p51 = pneg %p45
      %p52 = scmp.eq.s32.totalorder %s15, 1
      %p53 = por %p51, %p52
      %p54 = scmp.ne.s32.totalorder %s46, %s49
      %p55 = scmp.eq.s32.totalorder %s15, 0
      %p56 = por %p54, %p55
      %p57 = scmp.ne.s32.totalorder %s46, %s49
      %p58 = scmp.eq.s32.totalorder %s20, 1
      %p59 = por %p57, %p58
      %p60 = scmp.ne.s32.totalorder %s49, %s50
      %p61 = scmp.eq.s32.totalorder %s20, 0
      %p62 = por %p60, %p61
      %p63 = scmp.ne.s32.totalorder %s49, %s50
      %p64 = scmp.eq.s32.totalorder %s21, 1
      %p65 = por %p63, %p64
      %p67 = scmp.ne.s32.totalorder %s50, %s66
      %p68 = scmp.eq.s32.totalorder %s21, 0
      %p69 = por %p67, %p68
      %s71 = sadd.s32 %s70, 1
      %p74 = scmp.eq.s32.totalorder %s15, 1
      %p75 = scmp.ne.s32.totalorder %s70, %s72
      %p76 = scmp.eq.s32.totalorder %s15, 0
      %p77 = por %p75, %p76
      %p78 = scmp.ne.s32.totalorder %s70, %s72
      %p79 = scmp.eq.s32.totalorder %s20, 1
      %p80 = por %p78, %p79
      %p81 = scmp.ne.s32.totalorder %s72, %s73
      %p82 = scmp.eq.s32.totalorder %s20, 0
      %p83 = por %p81, %p82
      %p84 = scmp.ne.s32.totalorder %s72, %s73
      %p85 = scmp.eq.s32.totalorder %s21, 1
      %p86 = por %p84, %p85
      %p88 = scmp.ne.s32.totalorder %s73, %s87
      %p89 = scmp.eq.s32.totalorder %s21, 0
      %p90 = por %p88, %p89
      %s92 = sadd.s32 %s91, 1
      %p95 = scmp.eq.s32.totalorder %s15, 1
      %p96 = scmp.ne.s32.totalorder %s91, %s93
      %p97 = scmp.eq.s32.totalorder %s15, 0
      %p98 = por %p96, %p97
      %p99 = scmp.ne.s32.totalorder %s91, %s93
      %p100 = scmp.eq.s32.totalorder %s20, 1
      %p101 = por %p99, %p100
      %p102 = scmp.ne.s32.totalorder %s93, %s94
      %p103 = scmp.eq.s32.totalorder %s20, 0
      %p104 = por %p102, %p103
      %p105 = scmp.ne.s32.totalorder %s93, %s94
      %p106 = scmp.eq.s32.totalorder %s21, 1
      %p107 = por %p105, %p106
      %p109 = scmp.ne.s32.totalorder %s94, %s108
      %p110 = scmp.eq.s32.totalorder %s21, 0
      %p111 = por %p109, %p110
      %s113 = sadd.s32 %s112, 1
      %p116 = scmp.eq.s32.totalorder %s15, 1
      %p117 = scmp.ne.s32.totalorder %s112, %s114
      %p118 = scmp.eq.s32.totalorder %s15, 0
      %p119 = por %p117, %p118
      %p120 = scmp.ne.s32.totalorder %s112, %s114
      %p121 = scmp.eq.s32.totalorder %s20, 1
      %p122 = por %p120, %p121
      %p123 = scmp.ne.s32.totalorder %s114, %s115
      %p124 = scmp.eq.s32.totalorder %s20, 0
      %p125 = por %p123, %p124
      %p126 = scmp.ne.s32.totalorder %s114, %s115
      %p127 = scmp.eq.s32.totalorder %s21, 1
      %p128 = por %p126, %p127
      %p130 = scmp.ne.s32.totalorder %s115, %s129
      %p131 = scmp.eq.s32.totalorder %s21, 0
      %p132 = por %p130, %p131
      %s134 = sadd.s32 %s133, 1
      %p137 = scmp.eq.s32.totalorder %s15, 1
      %p138 = scmp.ne.s32.totalorder %s133, %s135
      %p139 = scmp.eq.s32.totalorder %s15, 0
      %p140 = por %p138, %p139
      %p141 = scmp.ne.s32.totalorder %s133, %s135
      %p142 = scmp.eq.s32.totalorder %s20, 1
      %p143 = por %p141, %p142
      %p144 = scmp.ne.s32.totalorder %s135, %s136
      %p145 = scmp.eq.s32.totalorder %s20, 0
      %p146 = por %p144, %p145
      %p147 = scmp.ne.s32.totalorder %s135, %s136
      %p148 = scmp.eq.s32.totalorder %s21, 1
      %p149 = por %p147, %p148
      %p151 = scmp.ne.s32.totalorder %s136, %s150
      %p152 = scmp.eq.s32.totalorder %s21, 0
      %p153 = por %p151, %p152
      %s154 = ssub.s32 %s15, %s22
      %p155 = scmp.eq.s32.totalorder %s154, 0
      %s157 = sadd.s32 %s156, 1
      %s158 = scalar_select %p155, %s156, %s157
      %p161 = pneg %p155
      %p162 = scmp.eq.s32.totalorder %s15, 1
      %p163 = por %p161, %p162
      %p164 = scmp.ne.s32.totalorder %s156, %s159
      %p165 = scmp.eq.s32.totalorder %s15, 0
      %p166 = por %p164, %p165
      %p167 = scmp.ne.s32.totalorder %s156, %s159
      %p168 = scmp.eq.s32.totalorder %s20, 1
      %p169 = por %p167, %p168
      %p170 = scmp.ne.s32.totalorder %s159, %s160
      %p171 = scmp.eq.s32.totalorder %s20, 0
      %p172 = por %p170, %p171
      %p173 = scmp.ne.s32.totalorder %s159, %s160
      %p174 = scmp.eq.s32.totalorder %s21, 1
      %p175 = por %p173, %p174
      %p177 = scmp.ne.s32.totalorder %s160, %s176
      %p178 = scmp.eq.s32.totalorder %s21, 0
      %p179 = por %p177, %p178
      %p180 = scmp.le.s32.totalorder 1, %s15
      %p181 = scmp.lt.s32.totalorder %s15, 3
      %p182 = pnand %p180, %p181
      %p183 = pneg %p182
      // Predicated region
      $region9: #{feedforward.1} parent=5 // pred_check
        _
      $region10: #{feedforward.1} parent=5 // pred_check_branch
        %185 = sbr.rel (%p182) target = $region12
      $region11: #{feedforward.1} parent=5 // pred_region
        %s186 = ssub.s32 %s15, 1
        // Predicated region
        $region13: #{feedforward.1} parent=11 // pred_check
          %p187 = pneg %p36
        $region14: #{feedforward.1} parent=11 // pred_check_branch
          %189 = sbr.rel (%p187) target = $region16
        $region15: #{feedforward.1} parent=11 // pred_region
          _
        $region16: #{feedforward.1} parent=11 // pred_fallthru
          _
        // Predicated region
        $region17: #{feedforward.1} parent=11 // pred_check
          %p190 = pneg %p83
        $region18: #{feedforward.1} parent=11 // pred_check_branch
          %192 = sbr.rel (%p190) target = $region20
        $region19: #{feedforward.1} parent=11 // pred_region
          _
        $region20: #{feedforward.1} parent=11 // pred_fallthru
          _
        // Predicated region
        $region21: #{feedforward.1} parent=11 // pred_check
          %p193 = pneg %p104
        $region22: #{feedforward.1} parent=11 // pred_check_branch
          %195 = sbr.rel (%p193) target = $region24
        $region23: #{feedforward.1} parent=11 // pred_region
          _
        $region24: #{feedforward.1} parent=11 // pred_fallthru
          _
        // Predicated region
        $region25: #{feedforward.1} parent=11 // pred_check
          %p196 = pneg %p125
        $region26: #{feedforward.1} parent=11 // pred_check_branch
          %198 = sbr.rel (%p196) target = $region28
        $region27: #{feedforward.1} parent=11 // pred_region
          _
        $region28: #{feedforward.1} parent=11 // pred_fallthru
          _
        // Predicated region
        $region29: #{feedforward.1} parent=11 // pred_check
          %p199 = pneg %p146
        $region30: #{feedforward.1} parent=11 // pred_check_branch
          %201 = sbr.rel (%p199) target = $region32
        $region31: #{feedforward.1} parent=11 // pred_region
          _
        $region32: #{feedforward.1} parent=11 // pred_fallthru
          _
      $region12: #{feedforward.1} parent=5 // pred_fallthru
        _
      %p202 = scmp.lt.s32.totalorder %s15, 2
      // Predicated region
      $region33: #{feedforward.1} parent=5 // pred_check
        %p203 = pneg %p202
      $region34: #{feedforward.1} parent=5 // pred_check_branch
        %205 = sbr.rel (%p203) target = $region36
      $region35: #{feedforward.1} parent=5 // pred_region
        // Predicated region
        $region37: #{feedforward.1} parent=35 // pred_check
          %p206 = pneg %p56
        $region38: #{feedforward.1} parent=35 // pred_check_branch
          %208 = sbr.rel (%p206) target = $region40
        $region39: #{feedforward.1} parent=35 // pred_region
          %p209 = scmp.lt.s32.totalorder %s15, 1
          %s210 = scalar_select %p209, %s15, 1
          %s211 = smul.addr %s210, 8
          %s212 = scalar_lea.vmem %s1, %s211
        $region40: #{feedforward.1} parent=35 // pred_fallthru
          _
      $region36: #{feedforward.1} parent=5 // pred_fallthru
        _
      %p213 = scmp.le.s32.totalorder 1, %s15
      %p214 = scmp.lt.s32.totalorder %s15, 3
      %p215 = pnand %p213, %p214
      %p216 = pneg %p215
      // Predicated region
      $region41: #{feedforward.1} parent=5 // pred_check
        _
      $region42: #{feedforward.1} parent=5 // pred_check_branch
        %218 = sbr.rel (%p215) target = $region44
      $region43: #{feedforward.1} parent=5 // pred_region
        %s219 = ssub.s32 %s15, 1
        %p220 = pneg %p36
        %p221 = pneg %p33
        %p222 = scmp.lt.s32.totalorder %s20, 1
        %s223 = scalar_select %p222, %s20, 1
        %s224 = smul.addr %s223, 8
        %s225 = scalar_lea.vmem %s1, %s224
        %p226 = pneg %p62
        %p227 = pneg %p59
        %p228 = pneg %p83
        %p229 = pneg %p80
        %p230 = pneg %p104
        %p231 = pneg %p101
        %p232 = pneg %p125
        %p233 = pneg %p122
        %p234 = pneg %p146
        %p235 = pneg %p143
        %p236 = pneg %p172
        %p237 = pneg %p169
        %s238 = sand.u32 %s159, 1
        %s239 = scalar_lea.sflag [#allocation4], %s238
        %s240 = sand.u32 %s159, 1
        %s241 = smul.addr %s240, 8
        %s242 = scalar_lea.vmem [#allocation3], %s241
        %p243 = scmp.lt.s32.totalorder %s20, 1
        %s244 = scalar_select %p243, %s20, 1
        %s245 = smul.addr %s244, 8
        %s246 = scalar_lea.vmem %s1, %s245
        %v248 = vld [vmem:[%s246] sm:$0xff]
        %v249 = vld [vmem:[%s0] sm:$0x1]
        %v250 = vlaneseq
        %v251 = vshrl.u32 %v250, 7
        %v252 = vsub.s32 0, %v251
        %v253 = vrot.slane %v249, %v252
        %v254 = vmul.f32 %v253, %v248
        %v255 = vld [vmem:[%s0 + $0x1] sm:$0x1]
        %v256 = vlaneseq
        %v257 = vshrl.u32 %v256, 7
        %v258 = vsub.s32 0, %v257
        %v259 = vrot.slane %v255, %v258
        %v260 = vadd.f32 %v254, %v259
        %v261 = vpack.c.bf16 %v260, %v260
        %v262 = vld [vmem:[%s2] sm:$0xff]
        %v263 = vld [vmem:[%s2 + $0x8] sm:$0xff]
        %v264 = vld [vmem:[%s2 + $0x10] sm:$0xff]
        %v265 = vld [vmem:[%s2 + $0x18] sm:$0xff]
        %v266 = vld [vmem:[%s2 + $0x20] sm:$0xff]
        %v267 = vld [vmem:[%s2 + $0x28] sm:$0xff]
        %v268 = vld [vmem:[%s2 + $0x30] sm:$0xff]
        %v269 = vld [vmem:[%s2 + $0x38] sm:$0xff]
        %v270 = vld [vmem:[%s2 + $0x40] sm:$0xff]
        %v271 = vld [vmem:[%s2 + $0x48] sm:$0xff]
        %v272 = vld [vmem:[%s2 + $0x50] sm:$0xff]
        %v273 = vld [vmem:[%s2 + $0x58] sm:$0xff]
        %v274 = vld [vmem:[%s2 + $0x60] sm:$0xff]
        %v275 = vld [vmem:[%s2 + $0x68] sm:$0xff]
        %v276 = vld [vmem:[%s2 + $0x70] sm:$0xff]
        %v277 = vld [vmem:[%s2 + $0x78] sm:$0xff]
        %v278 = vld [vmem:[%s2 + $0x80] sm:$0xff]
        %v279 = vld [vmem:[%s2 + $0x88] sm:$0xff]
        %v280 = vld [vmem:[%s2 + $0x90] sm:$0xff]
        %v281 = vld [vmem:[%s2 + $0x98] sm:$0xff]
        %v282 = vld [vmem:[%s2 + $0xa0] sm:$0xff]
        %v283 = vld [vmem:[%s2 + $0xa8] sm:$0xff]
        %v284 = vld [vmem:[%s2 + $0xb0] sm:$0xff]
        %v285 = vld [vmem:[%s2 + $0xb8] sm:$0xff]
        %v286 = vld [vmem:[%s2 + $0xc0] sm:$0xff]
        %v287 = vld [vmem:[%s2 + $0xc8] sm:$0xff]
        %v288 = vld [vmem:[%s2 + $0xd0] sm:$0xff]
        %v289 = vld [vmem:[%s2 + $0xd8] sm:$0xff]
        %v290 = vld [vmem:[%s2 + $0xe0] sm:$0xff]
        %v291 = vld [vmem:[%s2 + $0xe8] sm:$0xff]
        %v292 = vld [vmem:[%s2 + $0xf0] sm:$0xff]
        %v293 = vld [vmem:[%s2 + $0xf8] sm:$0xff]
        %v294 = vld [vmem:[%s3] sm:$0xf]
        %v296 = vlaneseq
        %v297 = vshrl.u32 %v296, 7
        %v298 = vsub.s32 0, %v297
        %v299 = vrot.slane %v294, %v298
        %v300 = vlaneseq
        %v301 = vshrl.u32 %v300, 7
        %v302 = vsub.s32 1, %v301
        %v303 = vrot.slane %v294, %v302
        %v304 = vlaneseq
        %v305 = vshrl.u32 %v304, 7
        %v306 = vsub.s32 2, %v305
        %v307 = vrot.slane %v294, %v306
        %v308 = vlaneseq
        %v309 = vshrl.u32 %v308, 7
        %v310 = vsub.s32 3, %v309
        %v311 = vrot.slane %v294, %v310
        %v348 = vunpack.c.l.b16 %v262
        %v349 = vunpack.c.h.b16 %v262
        %v350 = vunpack.c.l.b16 %v263
        %v351 = vunpack.c.h.b16 %v263
        %v352 = vunpack.c.l.b16 %v264
        %v353 = vunpack.c.h.b16 %v264
        %v354 = vunpack.c.l.b16 %v265
        %v355 = vunpack.c.h.b16 %v265
        %v356 = vunpack.c.l.b16 %v266
        %v357 = vunpack.c.h.b16 %v266
        %v358 = vunpack.c.l.b16 %v267
        %v359 = vunpack.c.h.b16 %v267
        %v360 = vunpack.c.l.b16 %v268
        %v361 = vunpack.c.h.b16 %v268
        %v362 = vunpack.c.l.b16 %v269
        %v363 = vunpack.c.h.b16 %v269
        %v364 = vunpack.c.l.b16 %v270
        %v365 = vunpack.c.h.b16 %v270
        %v366 = vunpack.c.l.b16 %v271
        %v367 = vunpack.c.h.b16 %v271
        %v368 = vunpack.c.l.b16 %v272
        %v369 = vunpack.c.h.b16 %v272
        %v370 = vunpack.c.l.b16 %v273
        %v371 = vunpack.c.h.b16 %v273
        %v372 = vunpack.c.l.b16 %v274
        %v373 = vunpack.c.h.b16 %v274
        %v374 = vunpack.c.l.b16 %v275
        %v375 = vunpack.c.h.b16 %v275
        %v376 = vunpack.c.l.b16 %v276
        %v377 = vunpack.c.h.b16 %v276
        %v378 = vunpack.c.l.b16 %v277
        %v379 = vunpack.c.h.b16 %v277
        %v380 = vunpack.c.l.b16 %v278
        %v381 = vunpack.c.h.b16 %v278
        %v382 = vunpack.c.l.b16 %v279
        %v383 = vunpack.c.h.b16 %v279
        %v384 = vunpack.c.l.b16 %v280
        %v385 = vunpack.c.h.b16 %v280
        %v386 = vunpack.c.l.b16 %v281
        %v387 = vunpack.c.h.b16 %v281
        %v388 = vunpack.c.l.b16 %v282
        %v389 = vunpack.c.h.b16 %v282
        %v390 = vunpack.c.l.b16 %v283
        %v391 = vunpack.c.h.b16 %v283
        %v392 = vunpack.c.l.b16 %v284
        %v393 = vunpack.c.h.b16 %v284
        %v394 = vunpack.c.l.b16 %v285
        %v395 = vunpack.c.h.b16 %v285
        %v396 = vunpack.c.l.b16 %v286
        %v397 = vunpack.c.h.b16 %v286
        %v398 = vunpack.c.l.b16 %v287
        %v399 = vunpack.c.h.b16 %v287
        %v400 = vunpack.c.l.b16 %v288
        %v401 = vunpack.c.h.b16 %v288
        %v402 = vunpack.c.l.b16 %v289
        %v403 = vunpack.c.h.b16 %v289
        %v404 = vunpack.c.l.b16 %v290
        %v405 = vunpack.c.h.b16 %v290
        %v406 = vunpack.c.l.b16 %v291
        %v407 = vunpack.c.h.b16 %v291
        %v408 = vunpack.c.l.b16 %v292
        %v409 = vunpack.c.h.b16 %v292
        %v410 = vunpack.c.l.b16 %v293
        %v411 = vunpack.c.h.b16 %v293
        %v412 = vpack.c.b16 %v352, %v348
        %v413 = vpack.c.b16 %v353, %v349
        %v414 = vpack.c.b16 %v354, %v350
        %v415 = vpack.c.b16 %v355, %v351
        %v416 = vpack.c.b16 %v360, %v356
        %v417 = vpack.c.b16 %v361, %v357
        %v418 = vpack.c.b16 %v362, %v358
        %v419 = vpack.c.b16 %v363, %v359
        %v420 = vpack.c.b16 %v368, %v364
        %v421 = vpack.c.b16 %v369, %v365
        %v422 = vpack.c.b16 %v370, %v366
        %v423 = vpack.c.b16 %v371, %v367
        %v424 = vpack.c.b16 %v376, %v372
        %v425 = vpack.c.b16 %v377, %v373
        %v426 = vpack.c.b16 %v378, %v374
        %v427 = vpack.c.b16 %v379, %v375
        %v428 = vpack.c.b16 %v384, %v380
        %v429 = vpack.c.b16 %v385, %v381
        %v430 = vpack.c.b16 %v386, %v382
        %v431 = vpack.c.b16 %v387, %v383
        %v432 = vpack.c.b16 %v392, %v388
        %v433 = vpack.c.b16 %v393, %v389
        %v434 = vpack.c.b16 %v394, %v390
        %v435 = vpack.c.b16 %v395, %v391
        %v436 = vpack.c.b16 %v400, %v396
        %v437 = vpack.c.b16 %v401, %v397
        %v438 = vpack.c.b16 %v402, %v398
        %v439 = vpack.c.b16 %v403, %v399
        %v440 = vpack.c.b16 %v408, %v404
        %v441 = vpack.c.b16 %v409, %v405
        %v442 = vpack.c.b16 %v410, %v406
        %v443 = vpack.c.b16 %v411, %v407
        %476 = vmatprep.subr.bf16.mxu0 %v413
        %477 = vmatpush1.bf16.msra.mxu0 %v412
        %478 = vmatprep.subr.bf16.mxu0 %v417
        %479 = vmatpush1.bf16.msra.mxu0 %v416
        %480 = vmatprep.subr.bf16.mxu0 %v421
        %481 = vmatpush1.bf16.msra.mxu0 %v420
        %482 = vmatprep.subr.bf16.mxu0 %v425
        %483 = vmatpush1.bf16.msra.mxu0 %v424
        %484 = vmatprep.subr.bf16.mxu0 %v429
        %485 = vmatpush1.bf16.msra.mxu0 %v428
        %486 = vmatprep.subr.bf16.mxu0 %v433
        %487 = vmatpush1.bf16.msra.mxu0 %v432
        %488 = vmatprep.subr.bf16.mxu0 %v437
        %489 = vmatpush1.bf16.msra.mxu0 %v436
        %490 = vmatprep.subr.bf16.mxu0 %v441
        %491 = vmatpush1.bf16.msra.mxu0 %v440
        %492 = vmatprep.subr.bf16.mxu0 0
        %493 = vmatpush1.bf16.msra.mxu0 0
        %494 = vmatprep.subr.bf16.mxu0 0
        %495 = vmatpush1.bf16.msra.mxu0 0
        %496 = vmatprep.subr.bf16.mxu0 0
        %497 = vmatpush1.bf16.msra.mxu0 0
        %498 = vmatprep.subr.bf16.mxu0 0
        %499 = vmatpush1.bf16.msra.mxu0 0
        %500 = vmatprep.subr.bf16.mxu0 0
        %501 = vmatpush1.bf16.msra.mxu0 0
        %502 = vmatprep.subr.bf16.mxu0 0
        %503 = vmatpush1.bf16.msra.mxu0 0
        %504 = vmatprep.subr.bf16.mxu0 0
        %505 = vmatpush1.bf16.msra.mxu0 0
        %506 = vmatprep.subr.bf16.mxu0 0
        %507 = vmatpush1.bf16.msra.mxu0 0
        %508 = vmatprep.mubr.bf16.mxu0 0
        %509 = vmatmul.mubr.bf16.gmra.mrb[0].mxu0 %v261
        %v510 = vpop.f32.mrb[0].mxu0
        %v511 = vadd.f32 %v299, %v510
        %v512 = vpop.f32.mrb[0].mxu0
        %v513 = vadd.f32 %v303, %v512
        %v514 = vpop.f32.mrb[0].mxu0
        %v515 = vpop.f32.mrb[0].mxu0
        %516 = vdwg.mxu0
        %517 = vmatprep.subr.bf16.mxu0 %v415
        %518 = vmatpush1.bf16.msra.mxu0 %v414
        %519 = vmatprep.subr.bf16.mxu0 %v419
        %520 = vmatpush1.bf16.msra.mxu0 %v418
        %521 = vmatprep.subr.bf16.mxu0 %v423
        %522 = vmatpush1.bf16.msra.mxu0 %v422
        %523 = vmatprep.subr.bf16.mxu0 %v427
        %524 = vmatpush1.bf16.msra.mxu0 %v426
        %525 = vmatprep.subr.bf16.mxu0 %v431
        %526 = vmatpush1.bf16.msra.mxu0 %v430
        %527 = vmatprep.subr.bf16.mxu0 %v435
        %528 = vmatpush1.bf16.msra.mxu0 %v434
        %529 = vmatprep.subr.bf16.mxu0 %v439
        %530 = vmatpush1.bf16.msra.mxu0 %v438
        %531 = vmatprep.subr.bf16.mxu0 %v443
        %532 = vmatpush1.bf16.msra.mxu0 %v442
        %533 = vmatprep.subr.bf16.mxu0 0
        %534 = vmatpush1.bf16.msra.mxu0 0
        %535 = vmatprep.subr.bf16.mxu0 0
        %536 = vmatpush1.bf16.msra.mxu0 0
        %537 = vmatprep.subr.bf16.mxu0 0
        %538 = vmatpush1.bf16.msra.mxu0 0
        %539 = vmatprep.subr.bf16.mxu0 0
        %540 = vmatpush1.bf16.msra.mxu0 0
        %541 = vmatprep.subr.bf16.mxu0 0
        %542 = vmatpush1.bf16.msra.mxu0 0
        %543 = vmatprep.subr.bf16.mxu0 0
        %544 = vmatpush1.bf16.msra.mxu0 0
        %545 = vmatprep.subr.bf16.mxu0 0
        %546 = vmatpush1.bf16.msra.mxu0 0
        %547 = vmatprep.subr.bf16.mxu0 0
        %548 = vmatpush1.bf16.msra.mxu0 0
        %549 = vmatprep.mubr.bf16.mxu0 0
        %550 = vmatmul.mubr.bf16.gmra.mrb[0].mxu0 %v261
        %v551 = vpop.f32.mrb[0].mxu0
        %v552 = vadd.f32 %v307, %v551
        %v553 = vpop.f32.mrb[0].mxu0
        %v554 = vadd.f32 %v311, %v553
        %v555 = vpop.f32.mrb[0].mxu0
        %v556 = vpop.f32.mrb[0].mxu0
        %557 = vdwg.mxu0
        %v558 = vmul.f32 %v511, %v511
        %v559 = vmul.f32 %v513, %v513
        %v560 = vmul.f32 %v552, %v552
        %v561 = vmul.f32 %v554, %v554
        %v562 = vmul.f32 %v511, %v558
        %v563 = vmul.f32 %v513, %v559
        %v564 = vmul.f32 %v552, %v560
        %v565 = vmul.f32 %v554, %v561
        %v566 = vmul.f32 %v562, 0.044715
        %v567 = vmul.f32 %v563, 0.044715
        %v568 = vmul.f32 %v564, 0.044715
        %v569 = vmul.f32 %v565, 0.044715
        %v570 = vadd.f32 %v511, %v566
        %v571 = vadd.f32 %v513, %v567
        %v572 = vadd.f32 %v552, %v568
        %v573 = vadd.f32 %v554, %v569
        %v574 = vmul.f32 %v570, 0.7978846
        %v575 = vmul.f32 %v571, 0.7978846
        %v576 = vmul.f32 %v572, 0.7978846
        %v577 = vmul.f32 %v573, 0.7978846
        %v578 = vtanh.pop %v574
        %v579 = vtanh.pop %v575
        %v580 = vtanh.pop %v576
        %v581 = vtanh.pop %v577
        %v582 = vadd.f32 %v578, 1.0
        %v583 = vadd.f32 %v579, 1.0
        %v584 = vadd.f32 %v580, 1.0
        %v585 = vadd.f32 %v581, 1.0
        %v586 = vmul.f32 %v582, 0.5
        %v587 = vmul.f32 %v583, 0.5
        %v588 = vmul.f32 %v584, 0.5
        %v589 = vmul.f32 %v585, 0.5
        %v590 = vmul.f32 %v511, %v586
        %v591 = vmul.f32 %v513, %v587
        %v592 = vmul.f32 %v552, %v588
        %v593 = vmul.f32 %v554, %v589
        %v594 = vpack.c.bf16 %v590, %v590
        %v595 = vpack.c.bf16 %v591, %v591
        %v596 = vpack.c.bf16 %v592, %v592
        %v597 = vpack.c.bf16 %v593, %v593
        %v598 = vld [vmem:[%s4] sm:$0xf]
        %v599 = vld [vmem:[%s4 + $0x4] sm:$0xf]
        %v600 = vld [vmem:[%s4 + $0x8] sm:$0xf]
        %v601 = vld [vmem:[%s4 + $0xc] sm:$0xf]
        %v602 = vld [vmem:[%s4 + $0x10] sm:$0xf]
        %v603 = vld [vmem:[%s4 + $0x14] sm:$0xf]
        %v604 = vld [vmem:[%s4 + $0x18] sm:$0xf]
        %v605 = vld [vmem:[%s4 + $0x1c] sm:$0xf]
        %v606 = vld [vmem:[%s4 + $0x20] sm:$0xf]
        %v607 = vld [vmem:[%s4 + $0x24] sm:$0xf]
        %v608 = vld [vmem:[%s4 + $0x28] sm:$0xf]
        %v609 = vld [vmem:[%s4 + $0x2c] sm:$0xf]
        %v610 = vld [vmem:[%s4 + $0x30] sm:$0xf]
        %v611 = vld [vmem:[%s4 + $0x34] sm:$0xf]
        %v612 = vld [vmem:[%s4 + $0x38] sm:$0xf]
        %v613 = vld [vmem:[%s4 + $0x3c] sm:$0xf]
        %v614 = vld [vmem:[%s4 + $0x40] sm:$0xf]
        %v615 = vld [vmem:[%s4 + $0x44] sm:$0xf]
        %v616 = vld [vmem:[%s4 + $0x48] sm:$0xf]
        %v617 = vld [vmem:[%s4 + $0x4c] sm:$0xf]
        %v618 = vld [vmem:[%s4 + $0x50] sm:$0xf]
        %v619 = vld [vmem:[%s4 + $0x54] sm:$0xf]
        %v620 = vld [vmem:[%s4 + $0x58] sm:$0xf]
        %v621 = vld [vmem:[%s4 + $0x5c] sm:$0xf]
        %v622 = vld [vmem:[%s4 + $0x60] sm:$0xf]
        %v623 = vld [vmem:[%s4 + $0x64] sm:$0xf]
        %v624 = vld [vmem:[%s4 + $0x68] sm:$0xf]
        %v625 = vld [vmem:[%s4 + $0x6c] sm:$0xf]
        %v626 = vld [vmem:[%s4 + $0x70] sm:$0xf]
        %v627 = vld [vmem:[%s4 + $0x74] sm:$0xf]
        %v628 = vld [vmem:[%s4 + $0x78] sm:$0xf]
        %v629 = vld [vmem:[%s4 + $0x7c] sm:$0xf]
        %v630 = vld [vmem:[%s4 + $0x80] sm:$0xf]
        %v631 = vld [vmem:[%s4 + $0x84] sm:$0xf]
        %v632 = vld [vmem:[%s4 + $0x88] sm:$0xf]
        %v633 = vld [vmem:[%s4 + $0x8c] sm:$0xf]
        %v634 = vld [vmem:[%s4 + $0x90] sm:$0xf]
        %v635 = vld [vmem:[%s4 + $0x94] sm:$0xf]
        %v636 = vld [vmem:[%s4 + $0x98] sm:$0xf]
        %v637 = vld [vmem:[%s4 + $0x9c] sm:$0xf]
        %v638 = vld [vmem:[%s4 + $0xa0] sm:$0xf]
        %v639 = vld [vmem:[%s4 + $0xa4] sm:$0xf]
        %v640 = vld [vmem:[%s4 + $0xa8] sm:$0xf]
        %v641 = vld [vmem:[%s4 + $0xac] sm:$0xf]
        %v642 = vld [vmem:[%s4 + $0xb0] sm:$0xf]
        %v643 = vld [vmem:[%s4 + $0xb4] sm:$0xf]
        %v644 = vld [vmem:[%s4 + $0xb8] sm:$0xf]
        %v645 = vld [vmem:[%s4 + $0xbc] sm:$0xf]
        %v646 = vld [vmem:[%s4 + $0xc0] sm:$0xf]
        %v647 = vld [vmem:[%s4 + $0xc4] sm:$0xf]
        %v648 = vld [vmem:[%s4 + $0xc8] sm:$0xf]
        %v649 = vld [vmem:[%s4 + $0xcc] sm:$0xf]
        %v650 = vld [vmem:[%s4 + $0xd0] sm:$0xf]
        %v651 = vld [vmem:[%s4 + $0xd4] sm:$0xf]
        %v652 = vld [vmem:[%s4 + $0xd8] sm:$0xf]
        %v653 = vld [vmem:[%s4 + $0xdc] sm:$0xf]
        %v654 = vld [vmem:[%s4 + $0xe0] sm:$0xf]
        %v655 = vld [vmem:[%s4 + $0xe4] sm:$0xf]
        %v656 = vld [vmem:[%s4 + $0xe8] sm:$0xf]
        %v657 = vld [vmem:[%s4 + $0xec] sm:$0xf]
        %v658 = vld [vmem:[%s4 + $0xf0] sm:$0xf]
        %v659 = vld [vmem:[%s4 + $0xf4] sm:$0xf]
        %v660 = vld [vmem:[%s4 + $0xf8] sm:$0xf]
        %v661 = vld [vmem:[%s4 + $0xfc] sm:$0xf]
        %v662 = vld [vmem:[%s5] sm:$0x1]
        %v664 = vlaneseq
        %v665 = vshrl.u32 %v664, 7
        %v666 = vsub.s32 0, %v665
        %v667 = vrot.slane %v662, %v666
        %v733 = vunpack.c.l.b16 %v598
        %v734 = vunpack.c.l.b16 %v599
        %v735 = vunpack.c.l.b16 %v600
        %v736 = vunpack.c.l.b16 %v601
        %v737 = vunpack.c.l.b16 %v602
        %v738 = vunpack.c.l.b16 %v603
        %v739 = vunpack.c.l.b16 %v604
        %v740 = vunpack.c.l.b16 %v605
        %v741 = vunpack.c.l.b16 %v606
        %v742 = vunpack.c.l.b16 %v607
        %v743 = vunpack.c.l.b16 %v608
        %v744 = vunpack.c.l.b16 %v609
        %v745 = vunpack.c.l.b16 %v610
        %v746 = vunpack.c.l.b16 %v611
        %v747 = vunpack.c.l.b16 %v612
        %v748 = vunpack.c.l.b16 %v613
        %v749 = vunpack.c.l.b16 %v614
        %v750 = vunpack.c.l.b16 %v615
        %v751 = vunpack.c.l.b16 %v616
        %v752 = vunpack.c.l.b16 %v617
        %v753 = vunpack.c.l.b16 %v618
        %v754 = vunpack.c.l.b16 %v619
        %v755 = vunpack.c.l.b16 %v620
        %v756 = vunpack.c.l.b16 %v621
        %v757 = vunpack.c.l.b16 %v622
        %v758 = vunpack.c.l.b16 %v623
        %v759 = vunpack.c.l.b16 %v624
        %v760 = vunpack.c.l.b16 %v625
        %v761 = vunpack.c.l.b16 %v626
        %v762 = vunpack.c.l.b16 %v627
        %v763 = vunpack.c.l.b16 %v628
        %v764 = vunpack.c.l.b16 %v629
        %v765 = vunpack.c.l.b16 %v630
        %v766 = vunpack.c.l.b16 %v631
        %v767 = vunpack.c.l.b16 %v632
        %v768 = vunpack.c.l.b16 %v633
        %v769 = vunpack.c.l.b16 %v634
        %v770 = vunpack.c.l.b16 %v635
        %v771 = vunpack.c.l.b16 %v636
        %v772 = vunpack.c.l.b16 %v637
        %v773 = vunpack.c.l.b16 %v638
        %v774 = vunpack.c.l.b16 %v639
        %v775 = vunpack.c.l.b16 %v640
        %v776 = vunpack.c.l.b16 %v641
        %v777 = vunpack.c.l.b16 %v642
        %v778 = vunpack.c.l.b16 %v643
        %v779 = vunpack.c.l.b16 %v644
        %v780 = vunpack.c.l.b16 %v645
        %v781 = vunpack.c.l.b16 %v646
        %v782 = vunpack.c.l.b16 %v647
        %v783 = vunpack.c.l.b16 %v648
        %v784 = vunpack.c.l.b16 %v649
        %v785 = vunpack.c.l.b16 %v650
        %v786 = vunpack.c.l.b16 %v651
        %v787 = vunpack.c.l.b16 %v652
        %v788 = vunpack.c.l.b16 %v653
        %v789 = vunpack.c.l.b16 %v654
        %v790 = vunpack.c.l.b16 %v655
        %v791 = vunpack.c.l.b16 %v656
        %v792 = vunpack.c.l.b16 %v657
        %v793 = vunpack.c.l.b16 %v658
        %v794 = vunpack.c.l.b16 %v659
        %v795 = vunpack.c.l.b16 %v660
        %v796 = vunpack.c.l.b16 %v661
        %v797 = vpack.c.b16 %v734, %v733
        %v798 = vpack.c.b16 %v736, %v735
        %v799 = vpack.c.b16 %v738, %v737
        %v800 = vpack.c.b16 %v740, %v739
        %v801 = vpack.c.b16 %v742, %v741
        %v802 = vpack.c.b16 %v744, %v743
        %v803 = vpack.c.b16 %v746, %v745
        %v804 = vpack.c.b16 %v748, %v747
        %v805 = vpack.c.b16 %v750, %v749
        %v806 = vpack.c.b16 %v752, %v751
        %v807 = vpack.c.b16 %v754, %v753
        %v808 = vpack.c.b16 %v756, %v755
        %v809 = vpack.c.b16 %v758, %v757
        %v810 = vpack.c.b16 %v760, %v759
        %v811 = vpack.c.b16 %v762, %v761
        %v812 = vpack.c.b16 %v764, %v763
        %v813 = vpack.c.b16 %v766, %v765
        %v814 = vpack.c.b16 %v768, %v767
        %v815 = vpack.c.b16 %v770, %v769
        %v816 = vpack.c.b16 %v772, %v771
        %v817 = vpack.c.b16 %v774, %v773
        %v818 = vpack.c.b16 %v776, %v775
        %v819 = vpack.c.b16 %v778, %v777
        %v820 = vpack.c.b16 %v780, %v779
        %v821 = vpack.c.b16 %v782, %v781
        %v822 = vpack.c.b16 %v784, %v783
        %v823 = vpack.c.b16 %v786, %v785
        %v824 = vpack.c.b16 %v788, %v787
        %v825 = vpack.c.b16 %v790, %v789
        %v826 = vpack.c.b16 %v792, %v791
        %v827 = vpack.c.b16 %v794, %v793
        %v828 = vpack.c.b16 %v796, %v795
        %861 = vmatprep.subr.bf16.mxu0 0
        %862 = vmatpush1.bf16.msra.mxu0 %v797
        %863 = vmatprep.subr.bf16.mxu0 0
        %864 = vmatpush1.bf16.msra.mxu0 %v798
        %865 = vmatprep.subr.bf16.mxu0 0
        %866 = vmatpush1.bf16.msra.mxu0 %v799
        %867 = vmatprep.subr.bf16.mxu0 0
        %868 = vmatpush1.bf16.msra.mxu0 %v800
        %869 = vmatprep.subr.bf16.mxu0 0
        %870 = vmatpush1.bf16.msra.mxu0 %v801
        %871 = vmatprep.subr.bf16.mxu0 0
        %872 = vmatpush1.bf16.msra.mxu0 %v802
        %873 = vmatprep.subr.bf16.mxu0 0
        %874 = vmatpush1.bf16.msra.mxu0 %v803
        %875 = vmatprep.subr.bf16.mxu0 0
        %876 = vmatpush1.bf16.msra.mxu0 %v804
        %877 = vmatprep.subr.bf16.mxu0 0
        %878 = vmatpush1.bf16.msra.mxu0 %v805
        %879 = vmatprep.subr.bf16.mxu0 0
        %880 = vmatpush1.bf16.msra.mxu0 %v806
        %881 = vmatprep.subr.bf16.mxu0 0
        %882 = vmatpush1.bf16.msra.mxu0 %v807
        %883 = vmatprep.subr.bf16.mxu0 0
        %884 = vmatpush1.bf16.msra.mxu0 %v808
        %885 = vmatprep.subr.bf16.mxu0 0
        %886 = vmatpush1.bf16.msra.mxu0 %v809
        %887 = vmatprep.subr.bf16.mxu0 0
        %888 = vmatpush1.bf16.msra.mxu0 %v810
        %889 = vmatprep.subr.bf16.mxu0 0
        %890 = vmatpush1.bf16.msra.mxu0 %v811
        %891 = vmatprep.subr.bf16.mxu0 0
        %892 = vmatpush1.bf16.msra.mxu0 %v812
        %893 = vmatprep.mubr.bf16.mxu0 %v595
        %894 = vmatmul.mubr.bf16.gmra.mrb[0].mxu0 %v594
        %v895 = vpop.f32.mrb[0].mxu0
        %v896 = vadd.f32 %v667, %v895
        %v897 = vpop.f32.mrb[0].mxu0
        %v898 = vpop.f32.mrb[0].mxu0
        %v899 = vpop.f32.mrb[0].mxu0
        %900 = vdwg.mxu0
        %901 = vmatprep.subr.bf16.mxu0 0
        %902 = vmatpush1.bf16.msra.mxu0 %v813
        %903 = vmatprep.subr.bf16.mxu0 0
        %904 = vmatpush1.bf16.msra.mxu0 %v814
        %905 = vmatprep.subr.bf16.mxu0 0
        %906 = vmatpush1.bf16.msra.mxu0 %v815
        %907 = vmatprep.subr.bf16.mxu0 0
        %908 = vmatpush1.bf16.msra.mxu0 %v816
        %909 = vmatprep.subr.bf16.mxu0 0
        %910 = vmatpush1.bf16.msra.mxu0 %v817
        %911 = vmatprep.subr.bf16.mxu0 0
        %912 = vmatpush1.bf16.msra.mxu0 %v818
        %913 = vmatprep.subr.bf16.mxu0 0
        %914 = vmatpush1.bf16.msra.mxu0 %v819
        %915 = vmatprep.subr.bf16.mxu0 0
        %916 = vmatpush1.bf16.msra.mxu0 %v820
        %917 = vmatprep.subr.bf16.mxu0 0
        %918 = vmatpush1.bf16.msra.mxu0 %v821
        %919 = vmatprep.subr.bf16.mxu0 0
        %920 = vmatpush1.bf16.msra.mxu0 %v822
        %921 = vmatprep.subr.bf16.mxu0 0
        %922 = vmatpush1.bf16.msra.mxu0 %v823
        %923 = vmatprep.subr.bf16.mxu0 0
        %924 = vmatpush1.bf16.msra.mxu0 %v824
        %925 = vmatprep.subr.bf16.mxu0 0
        %926 = vmatpush1.bf16.msra.mxu0 %v825
        %927 = vmatprep.subr.bf16.mxu0 0
        %928 = vmatpush1.bf16.msra.mxu0 %v826
        %929 = vmatprep.subr.bf16.mxu0 0
        %930 = vmatpush1.bf16.msra.mxu0 %v827
        %931 = vmatprep.subr.bf16.mxu0 0
        %932 = vmatpush1.bf16.msra.mxu0 %v828
        %933 = vmatprep.mubr.bf16.mxu0 %v597
        %934 = vmatmul.mubr.bf16.gmra.mrb[0].mxu0 %v596
        %v935 = vpop.f32.mrb[0].mxu0
        %v936 = vadd.f32 %v896, %v935
        %v937 = vpop.f32.mrb[0].mxu0
        %v938 = vpop.f32.mrb[0].mxu0
        %v939 = vpop.f32.mrb[0].mxu0
        %940 = vdwg.mxu0
        %v941 = vadd.f32 %v936, %v260
        %942 = vst [vmem:[%s242] sm:$0xff] %v941
        %s943 = sand.u32 %s159, 1
        %s944 = scalar_lea.sflag [#allocation4], %s943
        %s945 = sand.u32 %s159, 1
        %s946 = smul.addr %s945, 8
        %s947 = scalar_lea.vmem [#allocation3], %s946
        // Predicated region
        $region45: #{feedforward.1} parent=43 // pred_check
          %p948 = pneg %p169
        $region46: #{feedforward.1} parent=43 // pred_check_branch
          %950 = sbr.rel (%p948) target = $region48
        $region47: #{feedforward.1} parent=43 // pred_region
          %s952 = ssub.s32 128, 128
          %953 = vsyncadd %s944, %s952
          %s954 = smul.addr %s20, 128
          %s955 = scalar_lea.hbm %s6, %s954
          %s957 = sshll.u32 %s947, 4
          %s958 = int_to_ptr.vmem [resolvable:$true] %s957
          %960 = dma.vmem_to_hbm [thread:$0]  %s958, 128, %s955, %s944
        $region48: #{feedforward.1} parent=43 // pred_fallthru
          _
      $region44: #{feedforward.1} parent=5 // pred_fallthru
        _
      %p961 = scmp.le.s32.totalorder 2, %s15
      // Predicated region
      $region49: #{feedforward.1} parent=5 // pred_check
        %p962 = pneg %p961
      $region50: #{feedforward.1} parent=5 // pred_check_branch
        %964 = sbr.rel (%p962) target = $region52
      $region51: #{feedforward.1} parent=5 // pred_region
        %s965 = ssub.s32 %s15, 2
        // Predicated region
        $region53: #{feedforward.1} parent=51 // pred_check
          %p966 = pneg %p175
        $region54: #{feedforward.1} parent=51 // pred_check_branch
          %968 = sbr.rel (%p966) target = $region56
        $region55: #{feedforward.1} parent=51 // pred_region
          %s969 = sand.u32 %s160, 1
          %s970 = scalar_lea.sflag [#allocation4], %s969
          %s971 = sand.u32 %s160, 1
          %s972 = smul.addr %s971, 8
          %s973 = scalar_lea.vmem [#allocation3], %s972
          %974 = dma.done %s970, 128
        $region56: #{feedforward.1} parent=51 // pred_fallthru
          _
      $region52: #{feedforward.1} parent=5 // pred_fallthru
        _
    $region6: #{feedforward.1} parent=1 // loop_footer
      %s19 = sadd.s32 1, %s15
    $region7: #{feedforward.1} parent=1 // loop_footer_branch
      %14 = sbr.rel target = $region3
    $region8: #{feedforward.1} parent=1 // loop_exit
      _
    %975 = vsyncpa [#allocation4], 1
    %s976 = scalar_lea.sflag [#allocation4], 1
    %977 = vsyncpa %s976, 1

// kernel: feedforward.1
$region0: #{feedforward.1}
  #allocation0 [shape = 'u32[]', space=smem, size = 0x4, offset = 0x4, fixed_abs, tag = 'smem constant byte address 0x4 - core index']
  #allocation1 [shape = 'u32[144,128]{1,0:T(1,128)}', space=vmem, size = 0x12000, scoped, tag = 'internal scratch']
  #allocation2 [shape = 'f32[8,128]{1,0:T(8,128)}', space=vmem, size = 0x1000, scoped, tag = 'scratch operand']
  %s0 = inlined_call_operand.vmem [shape: f32[2,128], index: 0, kind: input, shape index: {}]
  %s1 = inlined_call_operand.vmem [shape: f32[16,128], index: 1, kind: input, shape index: {}]
  %s2 = inlined_call_operand.vmem [shape: bf16[128,512], index: 2, kind: input, shape index: {}]
  %s3 = inlined_call_operand.vmem [shape: f32[1,512], index: 3, kind: input, shape index: {}]
  %s4 = inlined_call_operand.vmem [shape: bf16[512,128], index: 4, kind: input, shape index: {}]
  %s5 = inlined_call_operand.vmem [shape: f32[1,128], index: 5, kind: input, shape index: {}]
  %s6 = inlined_call_operand.hbm [shape: f32[16,128], index: 6, kind: output, shape index: {}]
  %s7 = sld [smem:[#allocation0]]
  $region57: #{feedforward.1} parent=0
    _
  %s9 = ssub.s32 1, %s7
  %s10 = scalar_select 0, %s9, %s7
  $region1: #{feedforward.1} parent=0
    #allocation3 [shape = 'u8[8192]{0}', space=vmem, size = 0x2000, scoped, tag = 'output window, operand 0']
    #allocation4 [shape = 's32[2]{0}', space=sflag, size = 0x8, scoped, tag = 'scoped memory for feedforward.1']
    %11 = vsyncpa [#allocation4], 0
    %s12 = scalar_lea.sflag [#allocation4], 1
    %13 = vsyncpa %s12, 0
    loop: start=0, step=1, limit=4
    $region2: #{feedforward.1} parent=1 // loop_pre_header
      _
    $region3: #{feedforward.1} parent=1 // loop_header
      %s15 = sphi 0, %s19
      %p16 = scmp.ge.s32.totalorder %s15, 4
      %s23 = sphi 0, %s23
      %s25 = sphi 0, %s23
      %s26 = sphi 0, %s25
      %s40 = sphi 0, %s26
      %s46 = sphi 0, %s48
      %s49 = sphi 0, %s46
      %s50 = sphi 0, %s49
      %s66 = sphi 0, %s50
      %s70 = sphi 0, %s70
      %s72 = sphi 0, %s70
      %s73 = sphi 0, %s72
      %s87 = sphi 0, %s73
      %s91 = sphi 0, %s91
      %s93 = sphi 0, %s91
      %s94 = sphi 0, %s93
      %s108 = sphi 0, %s94
      %s112 = sphi 0, %s112
      %s114 = sphi 0, %s112
      %s115 = sphi 0, %s114
      %s129 = sphi 0, %s115
      %s133 = sphi 0, %s133
      %s135 = sphi 0, %s133
      %s136 = sphi 0, %s135
      %s150 = sphi 0, %s136
      %s156 = sphi 0, %s158
      %s159 = sphi 0, %s156
      %s160 = sphi 0, %s159
      %s176 = sphi 0, %s160
    $region4: #{feedforward.1} parent=1 // loop_header_branch
      %18 = sbr.rel (%p16) target = $region8
    $region5: #{feedforward.1} parent=1 // loop_body
      %s20 = ssub.s32 %s15, 1
      %s21 = ssub.s32 %s15, 2
      %s22 = sadd.s32 %s15, 1
      %s24 = sadd.s32 %s23, 1
      %p27 = scmp.eq.s32.totalorder %s15, 1
      %p28 = scmp.ne.s32.totalorder %s23, %s25
      %p29 = scmp.eq.s32.totalorder %s15, 0
      %p30 = por %p28, %p29
      %p31 = scmp.ne.s32.totalorder %s23, %s25
      %p32 = scmp.eq.s32.totalorder %s20, 1
      %p33 = por %p31, %p32
      %p34 = scmp.ne.s32.totalorder %s25, %s26
      %p35 = scmp.eq.s32.totalorder %s20, 0
      %p36 = por %p34, %p35
      %p37 = scmp.ne.s32.totalorder %s25, %s26
      %p38 = scmp.eq.s32.totalorder %s21, 1
      %p39 = por %p37, %p38
      %p41 = scmp.ne.s32.totalorder %s26, %s40
      %p42 = scmp.eq.s32.totalorder %s21, 0
      %p43 = por %p41, %p42
      %s44 = ssub.s32 %s15, %s22
      %p45 = scmp.eq.s32.totalorder %s44, 0
      %s47 = sadd.s32 %s46, 1
      %s48 = scalar_select %p45, %s46, %s47
      %p51 = pneg %p45
      %p52 = scmp.eq.s32.totalorder %s15, 1
      %p53 = por %p51, %p52
      %p54 = scmp.ne.s32.totalorder %s46, %s49
      %p55 = scmp.eq.s32.totalorder %s15, 0
      %p56 = por %p54, %p55
      %p57 = scmp.ne.s32.totalorder %s46, %s49
      %p58 = scmp.eq.s32.totalorder %s20, 1
      %p59 = por %p57, %p58
      %p60 = scmp.ne.s32.totalorder %s49, %s50
      %p61 = scmp.eq.s32.totalorder %s20, 0
      %p62 = por %p60, %p61
      %p63 = scmp.ne.s32.totalorder %s49, %s50
      %p64 = scmp.eq.s32.totalorder %s21, 1
      %p65 = por %p63, %p64
      %p67 = scmp.ne.s32.totalorder %s50, %s66
      %p68 = scmp.eq.s32.totalorder %s21, 0
      %p69 = por %p67, %p68
      %s71 = sadd.s32 %s70, 1
      %p74 = scmp.eq.s32.totalorder %s15, 1
      %p75 = scmp.ne.s32.totalorder %s70, %s72
      %p76 = scmp.eq.s32.totalorder %s15, 0
      %p77 = por %p75, %p76
      %p78 = scmp.ne.s32.totalorder %s70, %s72
      %p79 = scmp.eq.s32.totalorder %s20, 1
      %p80 = por %p78, %p79
      %p81 = scmp.ne.s32.totalorder %s72, %s73
      %p82 = scmp.eq.s32.totalorder %s20, 0
      %p83 = por %p81, %p82
      %p84 = scmp.ne.s32.totalorder %s72, %s73
      %p85 = scmp.eq.s32.totalorder %s21, 1
      %p86 = por %p84, %p85
      %p88 = scmp.ne.s32.totalorder %s73, %s87
      %p89 = scmp.eq.s32.totalorder %s21, 0
      %p90 = por %p88, %p89
      %s92 = sadd.s32 %s91, 1
      %p95 = scmp.eq.s32.totalorder %s15, 1
      %p96 = scmp.ne.s32.totalorder %s91, %s93
      %p97 = scmp.eq.s32.totalorder %s15, 0
      %p98 = por %p96, %p97
      %p99 = scmp.ne.s32.totalorder %s91, %s93
      %p100 = scmp.eq.s32.totalorder %s20, 1
      %p101 = por %p99, %p100
      %p102 = scmp.ne.s32.totalorder %s93, %s94
      %p103 = scmp.eq.s32.totalorder %s20, 0
      %p104 = por %p102, %p103
      %p105 = scmp.ne.s32.totalorder %s93, %s94
      %p106 = scmp.eq.s32.totalorder %s21, 1
      %p107 = por %p105, %p106
      %p109 = scmp.ne.s32.totalorder %s94, %s108
      %p110 = scmp.eq.s32.totalorder %s21, 0
      %p111 = por %p109, %p110
      %s113 = sadd.s32 %s112, 1
      %p116 = scmp.eq.s32.totalorder %s15, 1
      %p117 = scmp.ne.s32.totalorder %s112, %s114
      %p118 = scmp.eq.s32.totalorder %s15, 0
      %p119 = por %p117, %p118
      %p120 = scmp.ne.s32.totalorder %s112, %s114
      %p121 = scmp.eq.s32.totalorder %s20, 1
      %p122 = por %p120, %p121
      %p123 = scmp.ne.s32.totalorder %s114, %s115
      %p124 = scmp.eq.s32.totalorder %s20, 0
      %p125 = por %p123, %p124
      %p126 = scmp.ne.s32.totalorder %s114, %s115
      %p127 = scmp.eq.s32.totalorder %s21, 1
      %p128 = por %p126, %p127
      %p130 = scmp.ne.s32.totalorder %s115, %s129
      %p131 = scmp.eq.s32.totalorder %s21, 0
      %p132 = por %p130, %p131
      %s134 = sadd.s32 %s133, 1
      %p137 = scmp.eq.s32.totalorder %s15, 1
      %p138 = scmp.ne.s32.totalorder %s133, %s135
      %p139 = scmp.eq.s32.totalorder %s15, 0
      %p140 = por %p138, %p139
      %p141 = scmp.ne.s32.totalorder %s133, %s135
      %p142 = scmp.eq.s32.totalorder %s20, 1
      %p143 = por %p141, %p142
      %p144 = scmp.ne.s32.totalorder %s135, %s136
      %p145 = scmp.eq.s32.totalorder %s20, 0
      %p146 = por %p144, %p145
      %p147 = scmp.ne.s32.totalorder %s135, %s136
      %p148 = scmp.eq.s32.totalorder %s21, 1
      %p149 = por %p147, %p148
      %p151 = scmp.ne.s32.totalorder %s136, %s150
      %p152 = scmp.eq.s32.totalorder %s21, 0
      %p153 = por %p151, %p152
      %s154 = ssub.s32 %s15, %s22
      %p155 = scmp.eq.s32.totalorder %s154, 0
      %s157 = sadd.s32 %s156, 1
      %s158 = scalar_select %p155, %s156, %s157
      %p161 = pneg %p155
      %p162 = scmp.eq.s32.totalorder %s15, 1
      %p163 = por %p161, %p162
      %p164 = scmp.ne.s32.totalorder %s156, %s159
      %p165 = scmp.eq.s32.totalorder %s15, 0
      %p166 = por %p164, %p165
      %p167 = scmp.ne.s32.totalorder %s156, %s159
      %p168 = scmp.eq.s32.totalorder %s20, 1
      %p169 = por %p167, %p168
      %p170 = scmp.ne.s32.totalorder %s159, %s160
      %p171 = scmp.eq.s32.totalorder %s20, 0
      %p172 = por %p170, %p171
      %p173 = scmp.ne.s32.totalorder %s159, %s160
      %p174 = scmp.eq.s32.totalorder %s21, 1
      %p175 = por %p173, %p174
      %p177 = scmp.ne.s32.totalorder %s160, %s176
      %p178 = scmp.eq.s32.totalorder %s21, 0
      %p179 = por %p177, %p178
      %p180 = scmp.le.s32.totalorder 1, %s15
      %p181 = scmp.lt.s32.totalorder %s15, 3
      %p182 = pnand %p180, %p181
      %p183 = pneg %p182
      // Predicated region
      $region9: #{feedforward.1} parent=5 // pred_check
        _
      $region10: #{feedforward.1} parent=5 // pred_check_branch
        %185 = sbr.rel (%p182) target = $region12
      $region11: #{feedforward.1} parent=5 // pred_region
        %s186 = ssub.s32 %s15, 1
        // Predicated region
        $region13: #{feedforward.1} parent=11 // pred_check
          %p187 = pneg %p36
        $region14: #{feedforward.1} parent=11 // pred_check_branch
          %189 = sbr.rel (%p187) target = $region16
        $region15: #{feedforward.1} parent=11 // pred_region
          _
        $region16: #{feedforward.1} parent=11 // pred_fallthru
          _
        // Predicated region
        $region17: #{feedforward.1} parent=11 // pred_check
          %p190 = pneg %p83
        $region18: #{feedforward.1} parent=11 // pred_check_branch
          %192 = sbr.rel (%p190) target = $region20
        $region19: #{feedforward.1} parent=11 // pred_region
          _
        $region20: #{feedforward.1} parent=11 // pred_fallthru
          _
        // Predicated region
        $region21: #{feedforward.1} parent=11 // pred_check
          %p193 = pneg %p104
        $region22: #{feedforward.1} parent=11 // pred_check_branch
          %195 = sbr.rel (%p193) target = $region24
        $region23: #{feedforward.1} parent=11 // pred_region
          _
        $region24: #{feedforward.1} parent=11 // pred_fallthru
          _
        // Predicated region
        $region25: #{feedforward.1} parent=11 // pred_check
          %p196 = pneg %p125
        $region26: #{feedforward.1} parent=11 // pred_check_branch
          %198 = sbr.rel (%p196) target = $region28
        $region27: #{feedforward.1} parent=11 // pred_region
          _
        $region28: #{feedforward.1} parent=11 // pred_fallthru
          _
        // Predicated region
        $region29: #{feedforward.1} parent=11 // pred_check
          %p199 = pneg %p146
        $region30: #{feedforward.1} parent=11 // pred_check_branch
          %201 = sbr.rel (%p199) target = $region32
        $region31: #{feedforward.1} parent=11 // pred_region
          _
        $region32: #{feedforward.1} parent=11 // pred_fallthru
          _
      $region12: #{feedforward.1} parent=5 // pred_fallthru
        _
      %p202 = scmp.lt.s32.totalorder %s15, 2
      // Predicated region
      $region33: #{feedforward.1} parent=5 // pred_check
        %p203 = pneg %p202
      $region34: #{feedforward.1} parent=5 // pred_check_branch
        %205 = sbr.rel (%p203) target = $region36
      $region35: #{feedforward.1} parent=5 // pred_region
        // Predicated region
        $region37: #{feedforward.1} parent=35 // pred_check
          %p206 = pneg %p56
        $region38: #{feedforward.1} parent=35 // pred_check_branch
          %208 = sbr.rel (%p206) target = $region40
        $region39: #{feedforward.1} parent=35 // pred_region
          %p209 = scmp.lt.s32.totalorder %s15, 1
          %s210 = scalar_select %p209, %s15, 1
          %s211 = smul.addr %s210, 8
          %s212 = scalar_lea.vmem %s1, %s211
        $region40: #{feedforward.1} parent=35 // pred_fallthru
          _
      $region36: #{feedforward.1} parent=5 // pred_fallthru
        _
      %p213 = scmp.le.s32.totalorder 1, %s15
      %p214 = scmp.lt.s32.totalorder %s15, 3
      %p215 = pnand %p213, %p214
      %p216 = pneg %p215
      // Predicated region
      $region41: #{feedforward.1} parent=5 // pred_check
        _
      $region42: #{feedforward.1} parent=5 // pred_check_branch
        %218 = sbr.rel (%p215) target = $region44
      $region43: #{feedforward.1} parent=5 // pred_region
        %s219 = ssub.s32 %s15, 1
        %p220 = pneg %p36
        %p221 = pneg %p33
        %p222 = scmp.lt.s32.totalorder %s20, 1
        %s223 = scalar_select %p222, %s20, 1
        %s224 = smul.addr %s223, 8
        %s225 = scalar_lea.vmem %s1, %s224
        %p226 = pneg %p62
        %p227 = pneg %p59
        %p228 = pneg %p83
        %p229 = pneg %p80
        %p230 = pneg %p104
        %p231 = pneg %p101
        %p232 = pneg %p125
        %p233 = pneg %p122
        %p234 = pneg %p146
        %p235 = pneg %p143
        %p236 = pneg %p172
        %p237 = pneg %p169
        %s238 = sand.u32 %s159, 1
        %s239 = scalar_lea.sflag [#allocation4], %s238
        %s240 = sand.u32 %s159, 1
        %s241 = smul.addr %s240, 8
        %s242 = scalar_lea.vmem [#allocation3], %s241
        %p243 = scmp.lt.s32.totalorder %s20, 1
        %s244 = scalar_select %p243, %s20, 1
        %s245 = smul.addr %s244, 8
        %s246 = scalar_lea.vmem %s1, %s245
        %v248 = vld [vmem:[%s246] sm:$0xff]
        %v249 = vld [vmem:[%s0] sm:$0x1]
        %v250 = vlaneseq
        %v251 = vshrl.u32 %v250, 7
        %v252 = vsub.s32 0, %v251
        %v253 = vrot.slane %v249, %v252
        %v254 = vmul.f32 %v253, %v248
        %v255 = vld [vmem:[%s0 + $0x1] sm:$0x1]
        %v256 = vlaneseq
        %v257 = vshrl.u32 %v256, 7
        %v258 = vsub.s32 0, %v257
        %v259 = vrot.slane %v255, %v258
        %v260 = vadd.f32 %v254, %v259
        %v261 = vpack.c.bf16 %v260, %v260
        %v262 = vld [vmem:[%s2] sm:$0xff]
        %v263 = vld [vmem:[%s2 + $0x8] sm:$0xff]
        %v264 = vld [vmem:[%s2 + $0x10] sm:$0xff]
        %v265 = vld [vmem:[%s2 + $0x18] sm:$0xff]
        %v266 = vld [vmem:[%s2 + $0x20] sm:$0xff]
        %v267 = vld [vmem:[%s2 + $0x28] sm:$0xff]
        %v268 = vld [vmem:[%s2 + $0x30] sm:$0xff]
        %v269 = vld [vmem:[%s2 + $0x38] sm:$0xff]
        %v270 = vld [vmem:[%s2 + $0x40] sm:$0xff]
        %v271 = vld [vmem:[%s2 + $0x48] sm:$0xff]
        %v272 = vld [vmem:[%s2 + $0x50] sm:$0xff]
        %v273 = vld [vmem:[%s2 + $0x58] sm:$0xff]
        %v274 = vld [vmem:[%s2 + $0x60] sm:$0xff]
        %v275 = vld [vmem:[%s2 + $0x68] sm:$0xff]
        %v276 = vld [vmem:[%s2 + $0x70] sm:$0xff]
        %v277 = vld [vmem:[%s2 + $0x78] sm:$0xff]
        %v278 = vld [vmem:[%s2 + $0x80] sm:$0xff]
        %v279 = vld [vmem:[%s2 + $0x88] sm:$0xff]
        %v280 = vld [vmem:[%s2 + $0x90] sm:$0xff]
        %v281 = vld [vmem:[%s2 + $0x98] sm:$0xff]
        %v282 = vld [vmem:[%s2 + $0xa0] sm:$0xff]
        %v283 = vld [vmem:[%s2 + $0xa8] sm:$0xff]
        %v284 = vld [vmem:[%s2 + $0xb0] sm:$0xff]
        %v285 = vld [vmem:[%s2 + $0xb8] sm:$0xff]
        %v286 = vld [vmem:[%s2 + $0xc0] sm:$0xff]
        %v287 = vld [vmem:[%s2 + $0xc8] sm:$0xff]
        %v288 = vld [vmem:[%s2 + $0xd0] sm:$0xff]
        %v289 = vld [vmem:[%s2 + $0xd8] sm:$0xff]
        %v290 = vld [vmem:[%s2 + $0xe0] sm:$0xff]
        %v291 = vld [vmem:[%s2 + $0xe8] sm:$0xff]
        %v292 = vld [vmem:[%s2 + $0xf0] sm:$0xff]
        %v293 = vld [vmem:[%s2 + $0xf8] sm:$0xff]
        %v294 = vld [vmem:[%s3] sm:$0xf]
        %v296 = vlaneseq
        %v297 = vshrl.u32 %v296, 7
        %v298 = vsub.s32 0, %v297
        %v299 = vrot.slane %v294, %v298
        %v300 = vlaneseq
        %v301 = vshrl.u32 %v300, 7
        %v302 = vsub.s32 1, %v301
        %v303 = vrot.slane %v294, %v302
        %v304 = vlaneseq
        %v305 = vshrl.u32 %v304, 7
        %v306 = vsub.s32 2, %v305
        %v307 = vrot.slane %v294, %v306
        %v308 = vlaneseq
        %v309 = vshrl.u32 %v308, 7
        %v310 = vsub.s32 3, %v309
        %v311 = vrot.slane %v294, %v310
        %v348 = vunpack.c.l.b16 %v262
        %v349 = vunpack.c.h.b16 %v262
        %v350 = vunpack.c.l.b16 %v263
        %v351 = vunpack.c.h.b16 %v263
        %v352 = vunpack.c.l.b16 %v264
        %v353 = vunpack.c.h.b16 %v264
        %v354 = vunpack.c.l.b16 %v265
        %v355 = vunpack.c.h.b16 %v265
        %v356 = vunpack.c.l.b16 %v266
        %v357 = vunpack.c.h.b16 %v266
        %v358 = vunpack.c.l.b16 %v267
        %v359 = vunpack.c.h.b16 %v267
        %v360 = vunpack.c.l.b16 %v268
        %v361 = vunpack.c.h.b16 %v268
        %v362 = vunpack.c.l.b16 %v269
        %v363 = vunpack.c.h.b16 %v269
        %v364 = vunpack.c.l.b16 %v270
        %v365 = vunpack.c.h.b16 %v270
        %v366 = vunpack.c.l.b16 %v271
        %v367 = vunpack.c.h.b16 %v271
        %v368 = vunpack.c.l.b16 %v272
        %v369 = vunpack.c.h.b16 %v272
        %v370 = vunpack.c.l.b16 %v273
        %v371 = vunpack.c.h.b16 %v273
        %v372 = vunpack.c.l.b16 %v274
        %v373 = vunpack.c.h.b16 %v274
        %v374 = vunpack.c.l.b16 %v275
        %v375 = vunpack.c.h.b16 %v275
        %v376 = vunpack.c.l.b16 %v276
        %v377 = vunpack.c.h.b16 %v276
        %v378 = vunpack.c.l.b16 %v277
        %v379 = vunpack.c.h.b16 %v277
        %v380 = vunpack.c.l.b16 %v278
        %v381 = vunpack.c.h.b16 %v278
        %v382 = vunpack.c.l.b16 %v279
        %v383 = vunpack.c.h.b16 %v279
        %v384 = vunpack.c.l.b16 %v280
        %v385 = vunpack.c.h.b16 %v280
        %v386 = vunpack.c.l.b16 %v281
        %v387 = vunpack.c.h.b16 %v281
        %v388 = vunpack.c.l.b16 %v282
        %v389 = vunpack.c.h.b16 %v282
        %v390 = vunpack.c.l.b16 %v283
        %v391 = vunpack.c.h.b16 %v283
        %v392 = vunpack.c.l.b16 %v284
        %v393 = vunpack.c.h.b16 %v284
        %v394 = vunpack.c.l.b16 %v285
        %v395 = vunpack.c.h.b16 %v285
        %v396 = vunpack.c.l.b16 %v286
        %v397 = vunpack.c.h.b16 %v286
        %v398 = vunpack.c.l.b16 %v287
        %v399 = vunpack.c.h.b16 %v287
        %v400 = vunpack.c.l.b16 %v288
        %v401 = vunpack.c.h.b16 %v288
        %v402 = vunpack.c.l.b16 %v289
        %v403 = vunpack.c.h.b16 %v289
        %v404 = vunpack.c.l.b16 %v290
        %v405 = vunpack.c.h.b16 %v290
        %v406 = vunpack.c.l.b16 %v291
        %v407 = vunpack.c.h.b16 %v291
        %v408 = vunpack.c.l.b16 %v292
        %v409 = vunpack.c.h.b16 %v292
        %v410 = vunpack.c.l.b16 %v293
        %v411 = vunpack.c.h.b16 %v293
        %v412 = vpack.c.b16 %v352, %v348
        %v413 = vpack.c.b16 %v353, %v349
        %v414 = vpack.c.b16 %v354, %v350
        %v415 = vpack.c.b16 %v355, %v351
        %v416 = vpack.c.b16 %v360, %v356
        %v417 = vpack.c.b16 %v361, %v357
        %v418 = vpack.c.b16 %v362, %v358
        %v419 = vpack.c.b16 %v363, %v359
        %v420 = vpack.c.b16 %v368, %v364
        %v421 = vpack.c.b16 %v369, %v365
        %v422 = vpack.c.b16 %v370, %v366
        %v423 = vpack.c.b16 %v371, %v367
        %v424 = vpack.c.b16 %v376, %v372
        %v425 = vpack.c.b16 %v377, %v373
        %v426 = vpack.c.b16 %v378, %v374
        %v427 = vpack.c.b16 %v379, %v375
        %v428 = vpack.c.b16 %v384, %v380
        %v429 = vpack.c.b16 %v385, %v381
        %v430 = vpack.c.b16 %v386, %v382
        %v431 = vpack.c.b16 %v387, %v383
        %v432 = vpack.c.b16 %v392, %v388
        %v433 = vpack.c.b16 %v393, %v389
        %v434 = vpack.c.b16 %v394, %v390
        %v435 = vpack.c.b16 %v395, %v391
        %v436 = vpack.c.b16 %v400, %v396
        %v437 = vpack.c.b16 %v401, %v397
        %v438 = vpack.c.b16 %v402, %v398
        %v439 = vpack.c.b16 %v403, %v399
        %v440 = vpack.c.b16 %v408, %v404
        %v441 = vpack.c.b16 %v409, %v405
        %v442 = vpack.c.b16 %v410, %v406
        %v443 = vpack.c.b16 %v411, %v407
        %476 = vmatprep.subr.bf16.mxu0 %v413
        %477 = vmatpush1.bf16.msra.mxu0 %v412
        %478 = vmatprep.subr.bf16.mxu0 %v417
        %479 = vmatpush1.bf16.msra.mxu0 %v416
        %480 = vmatprep.subr.bf16.mxu0 %v421
        %481 = vmatpush1.bf16.msra.mxu0 %v420
        %482 = vmatprep.subr.bf16.mxu0 %v425
        %483 = vmatpush1.bf16.msra.mxu0 %v424
        %484 = vmatprep.subr.bf16.mxu0 %v429
        %485 = vmatpush1.bf16.msra.mxu0 %v428
        %486 = vmatprep.subr.bf16.mxu0 %v433
        %487 = vmatpush1.bf16.msra.mxu0 %v432
        %488 = vmatprep.subr.bf16.mxu0 %v437
        %489 = vmatpush1.bf16.msra.mxu0 %v436
        %490 = vmatprep.subr.bf16.mxu0 %v441
        %491 = vmatpush1.bf16.msra.mxu0 %v440
        %492 = vmatprep.subr.bf16.mxu0 0
        %493 = vmatpush1.bf16.msra.mxu0 0
        %494 = vmatprep.subr.bf16.mxu0 0
        %495 = vmatpush1.bf16.msra.mxu0 0
        %496 = vmatprep.subr.bf16.mxu0 0
        %497 = vmatpush1.bf16.msra.mxu0 0
        %498 = vmatprep.subr.bf16.mxu0 0
        %499 = vmatpush1.bf16.msra.mxu0 0
        %500 = vmatprep.subr.bf16.mxu0 0
        %501 = vmatpush1.bf16.msra.mxu0 0
        %502 = vmatprep.subr.bf16.mxu0 0
        %503 = vmatpush1.bf16.msra.mxu0 0
        %504 = vmatprep.subr.bf16.mxu0 0
        %505 = vmatpush1.bf16.msra.mxu0 0
        %506 = vmatprep.subr.bf16.mxu0 0
        %507 = vmatpush1.bf16.msra.mxu0 0
        %508 = vmatprep.mubr.bf16.mxu0 0
        %509 = vmatmul.mubr.bf16.gmra.mrb[0].mxu0 %v261
        %v510 = vpop.f32.mrb[0].mxu0
        %v511 = vadd.f32 %v299, %v510
        %v512 = vpop.f32.mrb[0].mxu0
        %v513 = vadd.f32 %v303, %v512
        %v514 = vpop.f32.mrb[0].mxu0
        %v515 = vpop.f32.mrb[0].mxu0
        %516 = vdwg.mxu0
        %517 = vmatprep.subr.bf16.mxu0 %v415
        %518 = vmatpush1.bf16.msra.mxu0 %v414
        %519 = vmatprep.subr.bf16.mxu0 %v419
        %520 = vmatpush1.bf16.msra.mxu0 %v418
        %521 = vmatprep.subr.bf16.mxu0 %v423
        %522 = vmatpush1.bf16.msra.mxu0 %v422
        %523 = vmatprep.subr.bf16.mxu0 %v427
        %524 = vmatpush1.bf16.msra.mxu0 %v426
        %525 = vmatprep.subr.bf16.mxu0 %v431
        %526 = vmatpush1.bf16.msra.mxu0 %v430
        %527 = vmatprep.subr.bf16.mxu0 %v435
        %528 = vmatpush1.bf16.msra.mxu0 %v434
        %529 = vmatprep.subr.bf16.mxu0 %v439
        %530 = vmatpush1.bf16.msra.mxu0 %v438
        %531 = vmatprep.subr.bf16.mxu0 %v443
        %532 = vmatpush1.bf16.msra.mxu0 %v442
        %533 = vmatprep.subr.bf16.mxu0 0
        %534 = vmatpush1.bf16.msra.mxu0 0
        %535 = vmatprep.subr.bf16.mxu0 0
        %536 = vmatpush1.bf16.msra.mxu0 0
        %537 = vmatprep.subr.bf16.mxu0 0
        %538 = vmatpush1.bf16.msra.mxu0 0
        %539 = vmatprep.subr.bf16.mxu0 0
        %540 = vmatpush1.bf16.msra.mxu0 0
        %541 = vmatprep.subr.bf16.mxu0 0
        %542 = vmatpush1.bf16.msra.mxu0 0
        %543 = vmatprep.subr.bf16.mxu0 0
        %544 = vmatpush1.bf16.msra.mxu0 0
        %545 = vmatprep.subr.bf16.mxu0 0
        %546 = vmatpush1.bf16.msra.mxu0 0
        %547 = vmatprep.subr.bf16.mxu0 0
        %548 = vmatpush1.bf16.msra.mxu0 0
        %549 = vmatprep.mubr.bf16.mxu0 0
        %550 = vmatmul.mubr.bf16.gmra.mrb[0].mxu0 %v261
        %v551 = vpop.f32.mrb[0].mxu0
        %v552 = vadd.f32 %v307, %v551
        %v553 = vpop.f32.mrb[0].mxu0
        %v554 = vadd.f32 %v311, %v553
        %v555 = vpop.f32.mrb[0].mxu0
        %v556 = vpop.f32.mrb[0].mxu0
        %557 = vdwg.mxu0
        %v558 = vmul.f32 %v511, %v511
        %v559 = vmul.f32 %v513, %v513
        %v560 = vmul.f32 %v552, %v552
        %v561 = vmul.f32 %v554, %v554
        %v562 = vmul.f32 %v511, %v558
        %v563 = vmul.f32 %v513, %v559
        %v564 = vmul.f32 %v552, %v560
        %v565 = vmul.f32 %v554, %v561
        %v566 = vmul.f32 %v562, 0.044715
        %v567 = vmul.f32 %v563, 0.044715
        %v568 = vmul.f32 %v564, 0.044715
        %v569 = vmul.f32 %v565, 0.044715
        %v570 = vadd.f32 %v511, %v566
        %v571 = vadd.f32 %v513, %v567
        %v572 = vadd.f32 %v552, %v568
        %v573 = vadd.f32 %v554, %v569
        %v574 = vmul.f32 %v570, 0.7978846
        %v575 = vmul.f32 %v571, 0.7978846
        %v576 = vmul.f32 %v572, 0.7978846
        %v577 = vmul.f32 %v573, 0.7978846
        %v578 = vtanh.pop %v574
        %v579 = vtanh.pop %v575
        %v580 = vtanh.pop %v576
        %v581 = vtanh.pop %v577
        %v582 = vadd.f32 %v578, 1.0
        %v583 = vadd.f32 %v579, 1.0
        %v584 = vadd.f32 %v580, 1.0
        %v585 = vadd.f32 %v581, 1.0
        %v586 = vmul.f32 %v582, 0.5
        %v587 = vmul.f32 %v583, 0.5
        %v588 = vmul.f32 %v584, 0.5
        %v589 = vmul.f32 %v585, 0.5
        %v590 = vmul.f32 %v511, %v586
        %v591 = vmul.f32 %v513, %v587
        %v592 = vmul.f32 %v552, %v588
        %v593 = vmul.f32 %v554, %v589
        %v594 = vpack.c.bf16 %v590, %v590
        %v595 = vpack.c.bf16 %v591, %v591
        %v596 = vpack.c.bf16 %v592, %v592
        %v597 = vpack.c.bf16 %v593, %v593
        %v598 = vld [vmem:[%s4] sm:$0xf]
        %v599 = vld [vmem:[%s4 + $0x4] sm:$0xf]
        %v600 = vld [vmem:[%s4 + $0x8] sm:$0xf]
        %v601 = vld [vmem:[%s4 + $0xc] sm:$0xf]
        %v602 = vld [vmem:[%s4 + $0x10] sm:$0xf]
        %v603 = vld [vmem:[%s4 + $0x14] sm:$0xf]
        %v604 = vld [vmem:[%s4 + $0x18] sm:$0xf]
        %v605 = vld [vmem:[%s4 + $0x1c] sm:$0xf]
        %v606 = vld [vmem:[%s4 + $0x20] sm:$0xf]
        %v607 = vld [vmem:[%s4 + $0x24] sm:$0xf]
        %v608 = vld [vmem:[%s4 + $0x28] sm:$0xf]
        %v609 = vld [vmem:[%s4 + $0x2c] sm:$0xf]
        %v610 = vld [vmem:[%s4 + $0x30] sm:$0xf]
        %v611 = vld [vmem:[%s4 + $0x34] sm:$0xf]
        %v612 = vld [vmem:[%s4 + $0x38] sm:$0xf]
        %v613 = vld [vmem:[%s4 + $0x3c] sm:$0xf]
        %v614 = vld [vmem:[%s4 + $0x40] sm:$0xf]
        %v615 = vld [vmem:[%s4 + $0x44] sm:$0xf]
        %v616 = vld [vmem:[%s4 + $0x48] sm:$0xf]
        %v617 = vld [vmem:[%s4 + $0x4c] sm:$0xf]
        %v618 = vld [vmem:[%s4 + $0x50] sm:$0xf]
        %v619 = vld [vmem:[%s4 + $0x54] sm:$0xf]
        %v620 = vld [vmem:[%s4 + $0x58] sm:$0xf]
        %v621 = vld [vmem:[%s4 + $0x5c] sm:$0xf]
        %v622 = vld [vmem:[%s4 + $0x60] sm:$0xf]
        %v623 = vld [vmem:[%s4 + $0x64] sm:$0xf]
        %v624 = vld [vmem:[%s4 + $0x68] sm:$0xf]
        %v625 = vld [vmem:[%s4 + $0x6c] sm:$0xf]
        %v626 = vld [vmem:[%s4 + $0x70] sm:$0xf]
        %v627 = vld [vmem:[%s4 + $0x74] sm:$0xf]
        %v628 = vld [vmem:[%s4 + $0x78] sm:$0xf]
        %v629 = vld [vmem:[%s4 + $0x7c] sm:$0xf]
        %v630 = vld [vmem:[%s4 + $0x80] sm:$0xf]
        %v631 = vld [vmem:[%s4 + $0x84] sm:$0xf]
        %v632 = vld [vmem:[%s4 + $0x88] sm:$0xf]
        %v633 = vld [vmem:[%s4 + $0x8c] sm:$0xf]
        %v634 = vld [vmem:[%s4 + $0x90] sm:$0xf]
        %v635 = vld [vmem:[%s4 + $0x94] sm:$0xf]
        %v636 = vld [vmem:[%s4 + $0x98] sm:$0xf]
        %v637 = vld [vmem:[%s4 + $0x9c] sm:$0xf]
        %v638 = vld [vmem:[%s4 + $0xa0] sm:$0xf]
        %v639 = vld [vmem:[%s4 + $0xa4] sm:$0xf]
        %v640 = vld [vmem:[%s4 + $0xa8] sm:$0xf]
        %v641 = vld [vmem:[%s4 + $0xac] sm:$0xf]
        %v642 = vld [vmem:[%s4 + $0xb0] sm:$0xf]
        %v643 = vld [vmem:[%s4 + $0xb4] sm:$0xf]
        %v644 = vld [vmem:[%s4 + $0xb8] sm:$0xf]
        %v645 = vld [vmem:[%s4 + $0xbc] sm:$0xf]
        %v646 = vld [vmem:[%s4 + $0xc0] sm:$0xf]
        %v647 = vld [vmem:[%s4 + $0xc4] sm:$0xf]
        %v648 = vld [vmem:[%s4 + $0xc8] sm:$0xf]
        %v649 = vld [vmem:[%s4 + $0xcc] sm:$0xf]
        %v650 = vld [vmem:[%s4 + $0xd0] sm:$0xf]
        %v651 = vld [vmem:[%s4 + $0xd4] sm:$0xf]
        %v652 = vld [vmem:[%s4 + $0xd8] sm:$0xf]
        %v653 = vld [vmem:[%s4 + $0xdc] sm:$0xf]
        %v654 = vld [vmem:[%s4 + $0xe0] sm:$0xf]
        %v655 = vld [vmem:[%s4 + $0xe4] sm:$0xf]
        %v656 = vld [vmem:[%s4 + $0xe8] sm:$0xf]
        %v657 = vld [vmem:[%s4 + $0xec] sm:$0xf]
        %v658 = vld [vmem:[%s4 + $0xf0] sm:$0xf]
        %v659 = vld [vmem:[%s4 + $0xf4] sm:$0xf]
        %v660 = vld [vmem:[%s4 + $0xf8] sm:$0xf]
        %v661 = vld [vmem:[%s4 + $0xfc] sm:$0xf]
        %v662 = vld [vmem:[%s5] sm:$0x1]
        %v664 = vlaneseq
        %v665 = vshrl.u32 %v664, 7
        %v666 = vsub.s32 0, %v665
        %v667 = vrot.slane %v662, %v666
        %v733 = vunpack.c.l.b16 %v598
        %v734 = vunpack.c.l.b16 %v599
        %v735 = vunpack.c.l.b16 %v600
        %v736 = vunpack.c.l.b16 %v601
        %v737 = vunpack.c.l.b16 %v602
        %v738 = vunpack.c.l.b16 %v603
        %v739 = vunpack.c.l.b16 %v604
        %v740 = vunpack.c.l.b16 %v605
        %v741 = vunpack.c.l.b16 %v606
        %v742 = vunpack.c.l.b16 %v607
        %v743 = vunpack.c.l.b16 %v608
        %v744 = vunpack.c.l.b16 %v609
        %v745 = vunpack.c.l.b16 %v610
        %v746 = vunpack.c.l.b16 %v611
        %v747 = vunpack.c.l.b16 %v612
        %v748 = vunpack.c.l.b16 %v613
        %v749 = vunpack.c.l.b16 %v614
        %v750 = vunpack.c.l.b16 %v615
        %v751 = vunpack.c.l.b16 %v616
        %v752 = vunpack.c.l.b16 %v617
        %v753 = vunpack.c.l.b16 %v618
        %v754 = vunpack.c.l.b16 %v619
        %v755 = vunpack.c.l.b16 %v620
        %v756 = vunpack.c.l.b16 %v621
        %v757 = vunpack.c.l.b16 %v622
        %v758 = vunpack.c.l.b16 %v623
        %v759 = vunpack.c.l.b16 %v624
        %v760 = vunpack.c.l.b16 %v625
        %v761 = vunpack.c.l.b16 %v626
        %v762 = vunpack.c.l.b16 %v627
        %v763 = vunpack.c.l.b16 %v628
        %v764 = vunpack.c.l.b16 %v629
        %v765 = vunpack.c.l.b16 %v630
        %v766 = vunpack.c.l.b16 %v631
        %v767 = vunpack.c.l.b16 %v632
        %v768 = vunpack.c.l.b16 %v633
        %v769 = vunpack.c.l.b16 %v634
        %v770 = vunpack.c.l.b16 %v635
        %v771 = vunpack.c.l.b16 %v636
        %v772 = vunpack.c.l.b16 %v637
        %v773 = vunpack.c.l.b16 %v638
        %v774 = vunpack.c.l.b16 %v639
        %v775 = vunpack.c.l.b16 %v640
        %v776 = vunpack.c.l.b16 %v641
        %v777 = vunpack.c.l.b16 %v642
        %v778 = vunpack.c.l.b16 %v643
        %v779 = vunpack.c.l.b16 %v644
        %v780 = vunpack.c.l.b16 %v645
        %v781 = vunpack.c.l.b16 %v646
        %v782 = vunpack.c.l.b16 %v647
        %v783 = vunpack.c.l.b16 %v648
        %v784 = vunpack.c.l.b16 %v649
        %v785 = vunpack.c.l.b16 %v650
        %v786 = vunpack.c.l.b16 %v651
        %v787 = vunpack.c.l.b16 %v652
        %v788 = vunpack.c.l.b16 %v653
        %v789 = vunpack.c.l.b16 %v654
        %v790 = vunpack.c.l.b16 %v655
        %v791 = vunpack.c.l.b16 %v656
        %v792 = vunpack.c.l.b16 %v657
        %v793 = vunpack.c.l.b16 %v658
        %v794 = vunpack.c.l.b16 %v659
        %v795 = vunpack.c.l.b16 %v660
        %v796 = vunpack.c.l.b16 %v661
        %v797 = vpack.c.b16 %v734, %v733
        %v798 = vpack.c.b16 %v736, %v735
        %v799 = vpack.c.b16 %v738, %v737
        %v800 = vpack.c.b16 %v740, %v739
        %v801 = vpack.c.b16 %v742, %v741
        %v802 = vpack.c.b16 %v744, %v743
        %v803 = vpack.c.b16 %v746, %v745
        %v804 = vpack.c.b16 %v748, %v747
        %v805 = vpack.c.b16 %v750, %v749
        %v806 = vpack.c.b16 %v752, %v751
        %v807 = vpack.c.b16 %v754, %v753
        %v808 = vpack.c.b16 %v756, %v755
        %v809 = vpack.c.b16 %v758, %v757
        %v810 = vpack.c.b16 %v760, %v759
        %v811 = vpack.c.b16 %v762, %v761
        %v812 = vpack.c.b16 %v764, %v763
        %v813 = vpack.c.b16 %v766, %v765
        %v814 = vpack.c.b16 %v768, %v767
        %v815 = vpack.c.b16 %v770, %v769
        %v816 = vpack.c.b16 %v772, %v771
        %v817 = vpack.c.b16 %v774, %v773
        %v818 = vpack.c.b16 %v776, %v775
        %v819 = vpack.c.b16 %v778, %v777
        %v820 = vpack.c.b16 %v780, %v779
        %v821 = vpack.c.b16 %v782, %v781
        %v822 = vpack.c.b16 %v784, %v783
        %v823 = vpack.c.b16 %v786, %v785
        %v824 = vpack.c.b16 %v788, %v787
        %v825 = vpack.c.b16 %v790, %v789
        %v826 = vpack.c.b16 %v792, %v791
        %v827 = vpack.c.b16 %v794, %v793
        %v828 = vpack.c.b16 %v796, %v795
        %861 = vmatprep.subr.bf16.mxu0 0
        %862 = vmatpush1.bf16.msra.mxu0 %v797
        %863 = vmatprep.subr.bf16.mxu0 0
        %864 = vmatpush1.bf16.msra.mxu0 %v798
        %865 = vmatprep.subr.bf16.mxu0 0
        %866 = vmatpush1.bf16.msra.mxu0 %v799
        %867 = vmatprep.subr.bf16.mxu0 0
        %868 = vmatpush1.bf16.msra.mxu0 %v800
        %869 = vmatprep.subr.bf16.mxu0 0
        %870 = vmatpush1.bf16.msra.mxu0 %v801
        %871 = vmatprep.subr.bf16.mxu0 0
        %872 = vmatpush1.bf16.msra.mxu0 %v802
        %873 = vmatprep.subr.bf16.mxu0 0
        %874 = vmatpush1.bf16.msra.mxu0 %v803
        %875 = vmatprep.subr.bf16.mxu0 0
        %876 = vmatpush1.bf16.msra.mxu0 %v804
        %877 = vmatprep.subr.bf16.mxu0 0
        %878 = vmatpush1.bf16.msra.mxu0 %v805
        %879 = vmatprep.subr.bf16.mxu0 0
        %880 = vmatpush1.bf16.msra.mxu0 %v806
        %881 = vmatprep.subr.bf16.mxu0 0
        %882 = vmatpush1.bf16.msra.mxu0 %v807
        %883 = vmatprep.subr.bf16.mxu0 0
        %884 = vmatpush1.bf16.msra.mxu0 %v808
        %885 = vmatprep.subr.bf16.mxu0 0
        %886 = vmatpush1.bf16.msra.mxu0 %v809
        %887 = vmatprep.subr.bf16.mxu0 0
        %888 = vmatpush1.bf16.msra.mxu0 %v810
        %889 = vmatprep.subr.bf16.mxu0 0
        %890 = vmatpush1.bf16.msra.mxu0 %v811
        %891 = vmatprep.subr.bf16.mxu0 0
        %892 = vmatpush1.bf16.msra.mxu0 %v812
        %893 = vmatprep.mubr.bf16.mxu0 %v595
        %894 = vmatmul.mubr.bf16.gmra.mrb[0].mxu0 %v594
        %v895 = vpop.f32.mrb[0].mxu0
        %v896 = vadd.f32 %v667, %v895
        %v897 = vpop.f32.mrb[0].mxu0
        %v898 = vpop.f32.mrb[0].mxu0
        %v899 = vpop.f32.mrb[0].mxu0
        %900 = vdwg.mxu0
        %901 = vmatprep.subr.bf16.mxu0 0
        %902 = vmatpush1.bf16.msra.mxu0 %v813
        %903 = vmatprep.subr.bf16.mxu0 0
        %904 = vmatpush1.bf16.msra.mxu0 %v814
        %905 = vmatprep.subr.bf16.mxu0 0
        %906 = vmatpush1.bf16.msra.mxu0 %v815
        %907 = vmatprep.subr.bf16.mxu0 0
        %908 = vmatpush1.bf16.msra.mxu0 %v816
        %909 = vmatprep.subr.bf16.mxu0 0
        %910 = vmatpush1.bf16.msra.mxu0 %v817
        %911 = vmatprep.subr.bf16.mxu0 0
        %912 = vmatpush1.bf16.msra.mxu0 %v818
        %913 = vmatprep.subr.bf16.mxu0 0
        %914 = vmatpush1.bf16.msra.mxu0 %v819
        %915 = vmatprep.subr.bf16.mxu0 0
        %916 = vmatpush1.bf16.msra.mxu0 %v820
        %917 = vmatprep.subr.bf16.mxu0 0
        %918 = vmatpush1.bf16.msra.mxu0 %v821
        %919 = vmatprep.subr.bf16.mxu0 0
        %920 = vmatpush1.bf16.msra.mxu0 %v822
        %921 = vmatprep.subr.bf16.mxu0 0
        %922 = vmatpush1.bf16.msra.mxu0 %v823
        %923 = vmatprep.subr.bf16.mxu0 0
        %924 = vmatpush1.bf16.msra.mxu0 %v824
        %925 = vmatprep.subr.bf16.mxu0 0
        %926 = vmatpush1.bf16.msra.mxu0 %v825
        %927 = vmatprep.subr.bf16.mxu0 0
        %928 = vmatpush1.bf16.msra.mxu0 %v826
        %929 = vmatprep.subr.bf16.mxu0 0
        %930 = vmatpush1.bf16.msra.mxu0 %v827
        %931 = vmatprep.subr.bf16.mxu0 0
        %932 = vmatpush1.bf16.msra.mxu0 %v828
        %933 = vmatprep.mubr.bf16.mxu0 %v597
        %934 = vmatmul.mubr.bf16.gmra.mrb[0].mxu0 %v596
        %v935 = vpop.f32.mrb[0].mxu0
        %v936 = vadd.f32 %v896, %v935
        %v937 = vpop.f32.mrb[0].mxu0
        %v938 = vpop.f32.mrb[0].mxu0
        %v939 = vpop.f32.mrb[0].mxu0
        %940 = vdwg.mxu0
        %v941 = vadd.f32 %v936, %v260
        %942 = vst [vmem:[%s242] sm:$0xff] %v941
        %s943 = sand.u32 %s159, 1
        %s944 = scalar_lea.sflag [#allocation4], %s943
        %s945 = sand.u32 %s159, 1
        %s946 = smul.addr %s945, 8
        %s947 = scalar_lea.vmem [#allocation3], %s946
        // Predicated region
        $region45: #{feedforward.1} parent=43 // pred_check
          %p948 = pneg %p169
        $region46: #{feedforward.1} parent=43 // pred_check_branch
          %950 = sbr.rel (%p948) target = $region48
        $region47: #{feedforward.1} parent=43 // pred_region
          %s952 = ssub.s32 128, 128
          %953 = vsyncadd %s944, %s952
          %s954 = smul.addr %s20, 128
          %s955 = scalar_lea.hbm %s6, %s954
          %s957 = sshll.u32 %s947, 4
          %s958 = int_to_ptr.vmem [resolvable:$true] %s957
          %960 = dma.vmem_to_hbm [thread:$0]  %s958, 128, %s955, %s944
        $region48: #{feedforward.1} parent=43 // pred_fallthru
          _
      $region44: #{feedforward.1} parent=5 // pred_fallthru
        _
      %p961 = scmp.le.s32.totalorder 2, %s15
      // Predicated region
      $region49: #{feedforward.1} parent=5 // pred_check
        %p962 = pneg %p961
      $region50: #{feedforward.1} parent=5 // pred_check_branch
        %964 = sbr.rel (%p962) target = $region52
      $region51: #{feedforward.1} parent=5 // pred_region
        %s965 = ssub.s32 %s15, 2
        // Predicated region
        $region53: #{feedforward.1} parent=51 // pred_check
          %p966 = pneg %p175
        $region54: #{feedforward.1} parent=51 // pred_check_branch
          %968 = sbr.rel (%p966) target = $region56
        $region55: #{feedforward.1} parent=51 // pred_region
          %s969 = sand.u32 %s160, 1
          %s970 = scalar_lea.sflag [#allocation4], %s969
          %s971 = sand.u32 %s160, 1
          %s972 = smul.addr %s971, 8
          %s973 = scalar_lea.vmem [#allocation3], %s972
          %974 = dma.done %s970, 128
        $region56: #{feedforward.1} parent=51 // pred_fallthru
          _
      $region52: #{feedforward.1} parent=5 // pred_fallthru
        _
    $region6: #{feedforward.1} parent=1 // loop_footer
      %s19 = sadd.s32 1, %s15
    $region7: #{feedforward.1} parent=1 // loop_footer_branch
      %14 = sbr.rel target = $region3
    $region8: #{feedforward.1} parent=1 // loop_exit
      _
    %975 = vsyncpa [#allocation4], 1
    %s976 = scalar_lea.sflag [#allocation4], 1
    %977 = vsyncpa %s976, 1

</llo_original>
